<compile_context>
chip_gen: v6e
topology: v6e:2x2x1
jax: 0.10.0
libtpu: 0.0.40
codegen_flags: <defaults>
</compile_context>

<pallas_src>
import functools
import math

import jax
import jax.numpy as jnp
from jax.experimental import pallas as pl
from jax.experimental.pallas import tpu as pltpu


def _layer_norm(x, w, b, eps=1e-5):
    mu = jnp.mean(x, axis=-1, keepdims=True)
    xc = x - mu
    var = jnp.mean(xc * xc, axis=-1, keepdims=True)
    return xc * jax.lax.rsqrt(var + eps) * w + b


def transformer_classifier_kernel(
    # inputs
    src_ref, pe_ref, proj_w_ref, proj_b_ref,
    qkv_w_ref, qkv_b_ref, out_w_ref, out_b_ref,
    ff1_w_ref, ff1_b_ref, ff2_w_ref, ff2_b_ref,
    ln1_w_ref, ln1_b_ref, ln2_w_ref, ln2_b_ref,
    cls_w_ref, cls_b_ref,
    # output
    out_ref,
    # scratch
    x_scratch, mask_scratch,
    *, num_heads,
):
    Bb, S, Din = src_ref.shape
    D = out_w_ref.shape[1]
    H = num_heads
    Dh = D // H
    layer = pl.program_id(1)
    bf16 = jnp.bfloat16

    # ---- layer 0: input projection * sqrt(d_model) + positional encoding; padding-mask bias ----
    @pl.when(layer == 0)
    def _init():
        src2 = src_ref[...].reshape(Bb * S, Din).astype(bf16)
        x0 = jnp.dot(src2, proj_w_ref[...], preferred_element_type=jnp.float32)
        x0 = (x0 + proj_b_ref[...]) * jnp.float32(math.sqrt(D))
        x0 = x0.reshape(Bb, S, D) + pe_ref[...][None, :, :]
        # create_padding_mask on the reassigned `src` (post-proj/PE): float 1.0 per non-zero-sum
        # key, added to attention logits (PyTorch float key_padding_mask semantics).
        mask_scratch[...] = (
            (jnp.sum(x0, axis=2) != 0.0).astype(jnp.float32).reshape(Bb, 1, S))
        x_scratch[...] = x0.astype(x_scratch.dtype)

    x = x_scratch[...].astype(jnp.float32)            # (Bb, S, D) resident activation
    x2 = x.reshape(Bb * S, D)
    x2_bf = x2.astype(bf16)

    # ---- multi-head self-attention ----
    # Fused QKV projection: one full-width matmul (N = 3D). 1/sqrt(Dh) is pre-folded into the
    # q columns of qkv_w / qkv_b on the host.
    qkv = jnp.dot(x2_bf, qkv_w_ref[...], preferred_element_type=jnp.float32) + qkv_b_ref[...]

    # Hoisted once per layer (JAX does not CSE broadcast_in_dim inside the unrolled head loop).
    key_bias = jnp.broadcast_to(mask_scratch[...], (Bb, S, S))      # (Bb, S, S) additive bias

    o_heads = []
    for h in range(H):
        qh = qkv[:, h * Dh:(h + 1) * Dh].reshape(Bb, S, Dh).astype(bf16)
        kh = qkv[:, D + h * Dh:D + (h + 1) * Dh].reshape(Bb, S, Dh).astype(bf16)
        vh = qkv[:, 2 * D + h * Dh:2 * D + (h + 1) * Dh].reshape(Bb, S, Dh).astype(bf16)

        s = jnp.einsum("bqd,bkd->bqk", qh, kh,
                       preferred_element_type=jnp.float32)          # (Bb, S, S), already scaled
        s = s + key_bias
        m = jnp.max(s, axis=-1, keepdims=True)
        p = jnp.exp(s - m)                                          # unnormalized probabilities
        l = jnp.sum(p, axis=-1, keepdims=True)

        oh = jnp.einsum("bqk,bkd->bqd", p.astype(bf16), vh,
                        preferred_element_type=jnp.float32)         # (Bb, S, Dh)
        oh = oh * pl.reciprocal(l, approx=True)                     # deferred softmax normalization
        o_heads.append(oh.reshape(Bb * S, Dh))

    # Head-major concat (== PyTorch concat(heads)) then a single full-K output projection.
    o_cat = jnp.concatenate(o_heads, axis=-1) if H > 1 else o_heads[0]     # (Bb*S, D)
    attn = jnp.dot(o_cat.astype(bf16), out_w_ref[...],
                   preferred_element_type=jnp.float32) + out_b_ref[...]

    # ---- residual + LayerNorm 1 (post-norm) ----
    y = _layer_norm(x2 + attn, ln1_w_ref[...], ln1_b_ref[...])

    # ---- feed-forward (ReLU); dropout = identity in eval ----
    hmid = jnp.dot(y.astype(bf16), ff1_w_ref[...],
                   preferred_element_type=jnp.float32) + ff1_b_ref[...]
    hmid = jnp.maximum(hmid, 0.0)
    ff = jnp.dot(hmid.astype(bf16), ff2_w_ref[...],
                 preferred_element_type=jnp.float32) + ff2_b_ref[...]

    # ---- residual + LayerNorm 2 ----
    y = _layer_norm(y + ff, ln2_w_ref[...], ln2_b_ref[...])
    x_scratch[...] = y.reshape(Bb, S, D).astype(x_scratch.dtype)

    # ---- last layer: mean pool over sequence + classification head (output dim 1 -> VPU) ----
    @pl.when(layer == pl.num_programs(1) - 1)
    def _finalize():
        pooled = jnp.mean(y.reshape(Bb, S, D), axis=1)                    # (Bb, D)
        out = jnp.sum(pooled * cls_w_ref[...], axis=-1, keepdims=True) + cls_b_ref[...]
        out_ref[...] = out                                                # (Bb, 1)


def positional_encoding(max_len, d_model):
    position = jnp.arange(max_len, dtype=jnp.float32)[:, None]
    div_term = jnp.exp(jnp.arange(0, d_model, 2, dtype=jnp.float32)
                       * (-math.log(10000.0) / d_model))
    pe = jnp.zeros((max_len, d_model), jnp.float32)
    pe = pe.at[:, 0::2].set(jnp.sin(position * div_term))
    pe = pe.at[:, 1::2].set(jnp.cos(position * div_term))
    return pe


def make_params(key, input_dim, d_model, num_layers, dim_feedforward):
    keys = iter(jax.random.split(key, 128))

    def uniform(shape, fan_in):
        bound = 1.0 / math.sqrt(fan_in)
        return jax.random.uniform(next(keys), shape, jnp.float32, -bound, bound)

    def stack(fn):
        return jnp.stack([fn() for _ in range(num_layers)], axis=0)

    return {
        "proj_w": uniform((input_dim, d_model), input_dim),
        "proj_b": uniform((1, d_model), input_dim),
        "in_w":  stack(lambda: uniform((d_model, 3 * d_model), d_model)),
        "in_b":  stack(lambda: uniform((1, 3 * d_model), d_model)),
        "out_w": stack(lambda: uniform((d_model, d_model), d_model)),
        "out_b": stack(lambda: uniform((1, d_model), d_model)),
        "ff1_w": stack(lambda: uniform((d_model, dim_feedforward), d_model)),
        "ff1_b": stack(lambda: uniform((1, dim_feedforward), d_model)),
        "ff2_w": stack(lambda: uniform((dim_feedforward, d_model), dim_feedforward)),
        "ff2_b": stack(lambda: uniform((1, d_model), dim_feedforward)),
        "ln1_w": jnp.ones((num_layers, 1, d_model), jnp.float32),
        "ln1_b": jnp.zeros((num_layers, 1, d_model), jnp.float32),
        "ln2_w": jnp.ones((num_layers, 1, d_model), jnp.float32),
        "ln2_b": jnp.zeros((num_layers, 1, d_model), jnp.float32),
        "cls_w": uniform((d_model, 1), d_model),
        "cls_b": uniform((1, 1), d_model),
    }


def transformer_classifier(src, pe, p, *, num_heads, num_layers, block_b=None,
                           act_dtype=jnp.float32, vmem_limit_bytes=64 * 1024 * 1024):
    """block_b=None -> whole batch in one tile (weights stream from HBM exactly once).
    On v7x use block_b=B//2 (one batch tile per TensorCore) and act_dtype=jnp.bfloat16."""
    B, S, Din = src.shape
    D = p["proj_w"].shape[1]
    F = p["ff1_w"].shape[2]
    H = num_heads
    L = num_layers
    if block_b is None:
        block_b = B
    assert D % H == 0 and B % block_b == 0
    Dh = D // H
    nb = B // block_b
    bf16 = jnp.bfloat16

    # Host-side repack: fold 1/sqrt(Dh) into the q columns of the fused in-proj; bf16 MXU operands.
    scale = 1.0 / math.sqrt(Dh)
    in_w, in_b = p["in_w"], p["in_b"]                                  # (L, D, 3D), (L, 1, 3D)
    qkv_w = jnp.concatenate([in_w[:, :, :D] * scale, in_w[:, :, D:]], axis=-1).astype(bf16)
    qkv_b = jnp.concatenate([in_b[:, :, :D] * scale, in_b[:, :, D:]], axis=-1)

    def rep_spec(shape):                                   # constant (replicated) block
        n = len(shape)
        return pl.BlockSpec(tuple(shape), lambda b, l, _n=n: (0,) * _n)

    def layer_spec(shape):                                 # streamed per layer (leading axis squeezed)
        n = len(shape)
        return pl.BlockSpec((None,) + tuple(shape), lambda b, l, _n=n: (l,) + (0,) * _n)

    in_specs = [
        pl.BlockSpec((block_b, S, Din), lambda b, l: (b, 0, 0)),   # src
        rep_spec((S, D)),                                          # positional encoding
        rep_spec((Din, D)), rep_spec((1, D)),                      # input projection
        layer_spec((D, 3 * D)), layer_spec((1, 3 * D)),            # fused qkv projection
        layer_spec((D, D)), layer_spec((1, D)),                    # attention out proj
        layer_spec((D, F)), layer_spec((1, F)),                    # ff1
        layer_spec((F, D)), layer_spec((1, D)),                    # ff2
        layer_spec((1, D)), layer_spec((1, D)),                    # ln1
        layer_spec((1, D)), layer_spec((1, D)),                    # ln2
        rep_spec((1, D)), rep_spec((1, 1)),                        # classification head
    ]
    out_spec = pl.BlockSpec((None, block_b, 1), lambda b, l: (b, 0, 0))

    grid_spec = pltpu.PrefetchScalarGridSpec(
        num_scalar_prefetch=0,
        grid=(nb, L),                                  # layer axis innermost (carried state)
        in_specs=in_specs,
        out_specs=out_spec,
        scratch_shapes=[
            pltpu.VMEM((block_b, S, D), act_dtype),    # resident activations across layers
            pltpu.VMEM((block_b, 1, S), jnp.float32),  # key-padding logit bias (computed once)
        ],
    )

    out = pl.pallas_call(
        functools.partial(transformer_classifier_kernel, num_heads=H),
        out_shape=jax.ShapeDtypeStruct((nb, block_b, 1), jnp.float32),
        grid_spec=grid_spec,
        compiler_params=pltpu.CompilerParams(
            dimension_semantics=("parallel", "arbitrary"),
            vmem_limit_bytes=vmem_limit_bytes),
    )(
        src, pe,
        p["proj_w"].astype(bf16), p["proj_b"],
        qkv_w, qkv_b,
        p["out_w"].astype(bf16), p["out_b"],
        p["ff1_w"].astype(bf16), p["ff1_b"],
        p["ff2_w"].astype(bf16), p["ff2_b"],
        p["ln1_w"], p["ln1_b"], p["ln2_w"], p["ln2_b"],
        p["cls_w"].T, p["cls_b"],
    )
    return out.reshape(B, 1)


def reference_forward(src, pe, p, *, num_heads, num_layers):
    """Pure-JAX f32 reference (same math as the PyTorch eval forward)."""
    B, S, _ = src.shape
    D = p["proj_w"].shape[1]
    Dh = D // num_heads
    x = (src @ p["proj_w"] + p["proj_b"]) * math.sqrt(D) + pe[None]
    key_bias = (x.sum(axis=2) != 0).astype(jnp.float32)                     # (B, S)
    for l in range(num_layers):
        qkv = x @ p["in_w"][l] + p["in_b"][l]
        q, k, v = jnp.split(qkv, 3, axis=-1)
        sh = lambda t: t.reshape(B, S, num_heads, Dh).transpose(0, 2, 1, 3)
        q, k, v = sh(q), sh(k), sh(v)
        s = jnp.einsum("bhqd,bhkd->bhqk", q, k) / math.sqrt(Dh) + key_bias[:, None, None, :]
        a = jax.nn.softmax(s, axis=-1)
        o = jnp.einsum("bhqk,bhkd->bhqd", a, v).transpose(0, 2, 1, 3).reshape(B, S, D)
        o = o @ p["out_w"][l] + p["out_b"][l]
        x = _layer_norm(x + o, p["ln1_w"][l], p["ln1_b"][l])
        h = jnp.maximum(x @ p["ff1_w"][l] + p["ff1_b"][l], 0.0)
        ff = h @ p["ff2_w"][l] + p["ff2_b"][l]
        x = _layer_norm(x + ff, p["ln2_w"][l], p["ln2_b"][l])
    pooled = x.mean(axis=1)
    return pooled @ p["cls_w"] + p["cls_b"]


if __name__ == "__main__":
    # Small shapes consistent with the module's forward.
    B, S = 2, 8
    input_dim, d_model, num_heads, num_layers, dim_feedforward = 16, 32, 4, 2, 64

    key = jax.random.PRNGKey(0)
    k_src, k_par = jax.random.split(key)
    src = jax.random.normal(k_src, (B, S, input_dim), jnp.float32)
    params = make_params(k_par, input_dim, d_model, num_layers, dim_feedforward)
    pe = positional_encoding(650, d_model)[:S]

    out = transformer_classifier(src, pe, params, num_heads=num_heads,
                                 num_layers=num_layers)        # block_b defaults to full batch
    out = jax.block_until_ready(out)

    ref = reference_forward(src, pe, params, num_heads=num_heads, num_layers=num_layers)

    assert out.shape == (B, 1)
    assert bool(jnp.all(jnp.isfinite(out)))
    # kernel uses bf16 MXU operands with f32 accumulation + approx reciprocal in softmax
    # -> compare to f32 reference with bf16-level tolerance
    assert bool(jnp.allclose(out, ref, atol=5e-2, rtol=5e-2)), (out, ref)
    print("KERNEL_OK")
</pallas_src>

<mosaic_0001>
module attributes {stable_mosaic.version = 11 : i64} {
  func.func @transformer_classifier_kernel(%arg0: i32, %arg1: i32, %arg2: memref<2x8x16xf32, #tpu.memory_space<vmem>>, %arg3: memref<8x32xf32, #tpu.memory_space<vmem>>, %arg4: memref<16x32xbf16, #tpu.memory_space<vmem>>, %arg5: memref<1x32xf32, #tpu.memory_space<vmem>>, %arg6: memref<1x32x96xbf16, #tpu.memory_space<vmem>>, %arg7: memref<1x1x96xf32, #tpu.memory_space<vmem>>, %arg8: memref<1x32x32xbf16, #tpu.memory_space<vmem>>, %arg9: memref<1x1x32xf32, #tpu.memory_space<vmem>>, %arg10: memref<1x32x64xbf16, #tpu.memory_space<vmem>>, %arg11: memref<1x1x64xf32, #tpu.memory_space<vmem>>, %arg12: memref<1x64x32xbf16, #tpu.memory_space<vmem>>, %arg13: memref<1x1x32xf32, #tpu.memory_space<vmem>>, %arg14: memref<1x1x32xf32, #tpu.memory_space<vmem>>, %arg15: memref<1x1x32xf32, #tpu.memory_space<vmem>>, %arg16: memref<1x1x32xf32, #tpu.memory_space<vmem>>, %arg17: memref<1x1x32xf32, #tpu.memory_space<vmem>>, %arg18: memref<1x32xf32, #tpu.memory_space<vmem>>, %arg19: memref<1x1xf32, #tpu.memory_space<vmem>>, %arg20: memref<1x2x1xf32, #tpu.memory_space<vmem>>, %arg21: memref<2x8x32xf32, #tpu.memory_space<vmem>>, %arg22: memref<2x1x8xf32, #tpu.memory_space<vmem>>) attributes {dimension_semantics = [#tpu.dimension_semantics<parallel>, #tpu.dimension_semantics<arbitrary>], iteration_bounds = array<i64: 1, 2>, scalar_prefetch = 0 : i64, scratch_operands = 2 : i64, tpu.core_type = #tpu.core_type<tc>, window_params = [{transform_indices = @transform_0, window_bounds = array<i64: 2, 8, 16>}, {pipeline_mode = #tpu.pipeline_mode<synchronous>, transform_indices = @transform_1, window_bounds = array<i64: 8, 32>}, {pipeline_mode = #tpu.pipeline_mode<synchronous>, transform_indices = @transform_2, window_bounds = array<i64: 16, 32>}, {pipeline_mode = #tpu.pipeline_mode<synchronous>, transform_indices = @transform_3, window_bounds = array<i64: 1, 32>}, {transform_indices = @transform_4, window_bounds = array<i64: 1, 32, 96>}, {transform_indices = @transform_5, window_bounds = array<i64: 1, 1, 96>}, {transform_indices = @transform_6, window_bounds = array<i64: 1, 32, 32>}, {transform_indices = @transform_7, window_bounds = array<i64: 1, 1, 32>}, {transform_indices = @transform_8, window_bounds = array<i64: 1, 32, 64>}, {transform_indices = @transform_9, window_bounds = array<i64: 1, 1, 64>}, {transform_indices = @transform_10, window_bounds = array<i64: 1, 64, 32>}, {transform_indices = @transform_11, window_bounds = array<i64: 1, 1, 32>}, {transform_indices = @transform_12, window_bounds = array<i64: 1, 1, 32>}, {transform_indices = @transform_13, window_bounds = array<i64: 1, 1, 32>}, {transform_indices = @transform_14, window_bounds = array<i64: 1, 1, 32>}, {transform_indices = @transform_15, window_bounds = array<i64: 1, 1, 32>}, {pipeline_mode = #tpu.pipeline_mode<synchronous>, transform_indices = @transform_16, window_bounds = array<i64: 1, 32>}, {pipeline_mode = #tpu.pipeline_mode<synchronous>, transform_indices = @transform_17, window_bounds = array<i64: 1, 1>}, {transform_indices = @transform_18, window_bounds = array<i64: 1, 2, 1>}]} {
    %c0_i32 = arith.constant 0 : i32
    %0 = arith.cmpi eq, %arg1, %c0_i32 : i32
    %1 = arith.extui %0 : i1 to i32
    %c0_i32_0 = arith.constant 0 : i32
    %2 = arith.cmpi ne, %1, %c0_i32_0 : i32
    scf.if %2 {
      %c0_76 = arith.constant 0 : index
      %c0_77 = arith.constant 0 : index
      %c0_78 = arith.constant 0 : index
      %194 = vector.load %arg2[%c0_76, %c0_77, %c0_78] : memref<2x8x16xf32, #tpu.memory_space<vmem>>, vector<2x8x16xf32>
      %195 = vector.shape_cast %194 : vector<2x8x16xf32> to vector<16x16xf32>
      %196 = arith.truncf %195 : vector<16x16xf32> to vector<16x16xbf16>
      %c0_79 = arith.constant 0 : index
      %c0_80 = arith.constant 0 : index
      %197 = vector.load %arg4[%c0_79, %c0_80] : memref<16x32xbf16, #tpu.memory_space<vmem>>, vector<16x32xbf16>
      %cst_81 = arith.constant dense<0.000000e+00> : vector<16x32xf32>
      %198 = tpu.matmul %196, %197, %cst_81 {dimension_numbers = #tpu.dot_dimension_numbers<[1], [0], [0], [1], [0, 0, 1, 1], [], []>} : vector<16x16xbf16>, vector<16x32xbf16>, vector<16x32xf32> -> vector<16x32xf32>
      %c0_82 = arith.constant 0 : index
      %c0_83 = arith.constant 0 : index
      %199 = vector.load %arg5[%c0_82, %c0_83] : memref<1x32xf32, #tpu.memory_space<vmem>>, vector<1x32xf32>
      %200 = vector.broadcast %199 : vector<1x32xf32> to vector<16x32xf32>
      %201 = arith.addf %198, %200 : vector<16x32xf32>
      %cst_84 = arith.constant 5.65685415 : f32
      %202 = vector.broadcast %cst_84 : f32 to vector<16x32xf32>
      %203 = arith.mulf %201, %202 : vector<16x32xf32>
      %204 = vector.shape_cast %203 : vector<16x32xf32> to vector<2x8x32xf32>
      %c0_85 = arith.constant 0 : index
      %c0_86 = arith.constant 0 : index
      %205 = vector.load %arg3[%c0_85, %c0_86] : memref<8x32xf32, #tpu.memory_space<vmem>>, vector<8x32xf32>
      %206 = vector.shape_cast %205 : vector<8x32xf32> to vector<1x8x32xf32>
      %207 = vector.broadcast %206 : vector<1x8x32xf32> to vector<2x8x32xf32>
      %208 = arith.addf %204, %207 : vector<2x8x32xf32>
      %cst_87 = arith.constant dense<0.000000e+00> : vector<2x8xf32>
      %209 = vector.multi_reduction <add>, %208, %cst_87 [2] : vector<2x8x32xf32> to vector<2x8xf32>
      %cst_88 = arith.constant 0.000000e+00 : f32
      %210 = vector.broadcast %cst_88 : f32 to vector<2x8xf32>
      %211 = arith.cmpf one, %209, %210 : vector<2x8xf32>
      %212 = arith.extui %211 : vector<2x8xi1> to vector<2x8xi32>
      %213 = arith.sitofp %212 : vector<2x8xi32> to vector<2x8xf32>
      %214 = vector.shape_cast %213 : vector<2x8xf32> to vector<2x1x8xf32>
      %c0_89 = arith.constant 0 : index
      %c0_90 = arith.constant 0 : index
      %c0_91 = arith.constant 0 : index
      %215 = vector.load %arg22[%c0_89, %c0_90, %c0_91] : memref<2x1x8xf32, #tpu.memory_space<vmem>>, vector<2x1x8xf32>
      tpu.vector_store %arg22[%c0_89, %c0_90, %c0_91], %214 {strides = array<i32>} : memref<2x1x8xf32, #tpu.memory_space<vmem>>, vector<2x1x8xf32>,
      %c0_92 = arith.constant 0 : index
      %c0_93 = arith.constant 0 : index
      %c0_94 = arith.constant 0 : index
      %216 = vector.load %arg21[%c0_92, %c0_93, %c0_94] : memref<2x8x32xf32, #tpu.memory_space<vmem>>, vector<2x8x32xf32>
      tpu.vector_store %arg21[%c0_92, %c0_93, %c0_94], %208 {strides = array<i32>} : memref<2x8x32xf32, #tpu.memory_space<vmem>>, vector<2x8x32xf32>,
    } else {
    }
    %c0 = arith.constant 0 : index
    %c0_1 = arith.constant 0 : index
    %c0_2 = arith.constant 0 : index
    %3 = vector.load %arg21[%c0, %c0_1, %c0_2] : memref<2x8x32xf32, #tpu.memory_space<vmem>>, vector<2x8x32xf32>
    %4 = vector.shape_cast %3 : vector<2x8x32xf32> to vector<16x32xf32>
    %5 = arith.truncf %4 : vector<16x32xf32> to vector<16x32xbf16>
    %c0_3 = arith.constant 0 : index
    %c0_4 = arith.constant 0 : index
    %c0_5 = arith.constant 0 : index
    %6 = vector.load %arg6[%c0_3, %c0_4, %c0_5] : memref<1x32x96xbf16, #tpu.memory_space<vmem>>, vector<1x32x96xbf16>
    %7 = vector.shape_cast %6 : vector<1x32x96xbf16> to vector<32x96xbf16>
    %cst = arith.constant dense<0.000000e+00> : vector<16x96xf32>
    %8 = tpu.matmul %5, %7, %cst {dimension_numbers = #tpu.dot_dimension_numbers<[1], [0], [0], [1], [0, 0, 1, 1], [], []>} : vector<16x32xbf16>, vector<32x96xbf16>, vector<16x96xf32> -> vector<16x96xf32>
    %c0_6 = arith.constant 0 : index
    %c0_7 = arith.constant 0 : index
    %c0_8 = arith.constant 0 : index
    %9 = vector.load %arg7[%c0_6, %c0_7, %c0_8] : memref<1x1x96xf32, #tpu.memory_space<vmem>>, vector<1x1x96xf32>
    %10 = vector.shape_cast %9 : vector<1x1x96xf32> to vector<1x96xf32>
    %11 = vector.broadcast %10 : vector<1x96xf32> to vector<16x96xf32>
    %12 = arith.addf %8, %11 : vector<16x96xf32>
    %c0_9 = arith.constant 0 : index
    %c0_10 = arith.constant 0 : index
    %c0_11 = arith.constant 0 : index
    %13 = vector.load %arg22[%c0_9, %c0_10, %c0_11] : memref<2x1x8xf32, #tpu.memory_space<vmem>>, vector<2x1x8xf32>
    %14 = vector.shape_cast %13 : vector<2x1x8xf32> to vector<2x1x8xf32>
    %15 = vector.broadcast %14 : vector<2x1x8xf32> to vector<2x8x8xf32>
    %16 = vector.extract_strided_slice %12 {offsets = [0, 0], sizes = [16, 8], strides = [1, 1]} : vector<16x96xf32> to vector<16x8xf32>
    %17 = vector.shape_cast %16 : vector<16x8xf32> to vector<2x8x8xf32>
    %18 = arith.truncf %17 : vector<2x8x8xf32> to vector<2x8x8xbf16>
    %19 = vector.extract_strided_slice %12 {offsets = [0, 32], sizes = [16, 8], strides = [1, 1]} : vector<16x96xf32> to vector<16x8xf32>
    %20 = vector.shape_cast %19 : vector<16x8xf32> to vector<2x8x8xf32>
    %21 = arith.truncf %20 : vector<2x8x8xf32> to vector<2x8x8xbf16>
    %22 = vector.extract_strided_slice %12 {offsets = [0, 64], sizes = [16, 8], strides = [1, 1]} : vector<16x96xf32> to vector<16x8xf32>
    %23 = vector.shape_cast %22 : vector<16x8xf32> to vector<2x8x8xf32>
    %24 = arith.truncf %23 : vector<2x8x8xf32> to vector<2x8x8xbf16>
    "tpu.trace_start"() <{level = 10 : i32, message = "bqd,bkd->bqk"}> : () -> ()
    %cst_12 = arith.constant dense<0.000000e+00> : vector<2x8x8xf32>
    %25 = tpu.matmul %18, %21, %cst_12 {dimension_numbers = #tpu.dot_dimension_numbers<[2], [2], [1], [1], [0, 0, 0, 1, 1, 1], [0], [0]>} : vector<2x8x8xbf16>, vector<2x8x8xbf16>, vector<2x8x8xf32> -> vector<2x8x8xf32>
    "tpu.trace_stop"() : () -> ()
    %26 = arith.addf %25, %15 : vector<2x8x8xf32>
    %cst_13 = arith.constant dense<0xFF800000> : vector<2x8xf32>
    %27 = vector.multi_reduction <maximumf>, %26, %cst_13 [2] : vector<2x8x8xf32> to vector<2x8xf32>
    %28 = vector.shape_cast %27 : vector<2x8xf32> to vector<2x8x1xf32>
    %29 = vector.broadcast %28 : vector<2x8x1xf32> to vector<2x8x8xf32>
    %30 = arith.subf %26, %29 : vector<2x8x8xf32>
    %31 = math.exp %30 : vector<2x8x8xf32>
    %cst_14 = arith.constant dense<0.000000e+00> : vector<2x8xf32>
    %32 = vector.multi_reduction <add>, %31, %cst_14 [2] : vector<2x8x8xf32> to vector<2x8xf32>
    %33 = vector.shape_cast %32 : vector<2x8xf32> to vector<2x8x1xf32>
    %34 = arith.truncf %31 : vector<2x8x8xf32> to vector<2x8x8xbf16>
    "tpu.trace_start"() <{level = 10 : i32, message = "bqk,bkd->bqd"}> : () -> ()
    %cst_15 = arith.constant dense<0.000000e+00> : vector<2x8x8xf32>
    %35 = tpu.matmul %34, %24, %cst_15 {dimension_numbers = #tpu.dot_dimension_numbers<[2], [1], [1], [2], [0, 0, 0, 1, 1, 2], [0], [0]>} : vector<2x8x8xbf16>, vector<2x8x8xbf16>, vector<2x8x8xf32> -> vector<2x8x8xf32>
    "tpu.trace_stop"() : () -> ()
    %36 = tpu.reciprocal %33 {approx = true} : vector<2x8x1xf32> -> vector<2x8x1xf32>
    %37 = vector.broadcast %36 : vector<2x8x1xf32> to vector<2x8x8xf32>
    %38 = arith.mulf %35, %37 : vector<2x8x8xf32>
    %39 = vector.shape_cast %38 : vector<2x8x8xf32> to vector<16x8xf32>
    %40 = vector.extract_strided_slice %12 {offsets = [0, 8], sizes = [16, 8], strides = [1, 1]} : vector<16x96xf32> to vector<16x8xf32>
    %41 = vector.shape_cast %40 : vector<16x8xf32> to vector<2x8x8xf32>
    %42 = arith.truncf %41 : vector<2x8x8xf32> to vector<2x8x8xbf16>
    %43 = vector.extract_strided_slice %12 {offsets = [0, 40], sizes = [16, 8], strides = [1, 1]} : vector<16x96xf32> to vector<16x8xf32>
    %44 = vector.shape_cast %43 : vector<16x8xf32> to vector<2x8x8xf32>
    %45 = arith.truncf %44 : vector<2x8x8xf32> to vector<2x8x8xbf16>
    %46 = vector.extract_strided_slice %12 {offsets = [0, 72], sizes = [16, 8], strides = [1, 1]} : vector<16x96xf32> to vector<16x8xf32>
    %47 = vector.shape_cast %46 : vector<16x8xf32> to vector<2x8x8xf32>
    %48 = arith.truncf %47 : vector<2x8x8xf32> to vector<2x8x8xbf16>
    "tpu.trace_start"() <{level = 10 : i32, message = "bqd,bkd->bqk"}> : () -> ()
    %cst_16 = arith.constant dense<0.000000e+00> : vector<2x8x8xf32>
    %49 = tpu.matmul %42, %45, %cst_16 {dimension_numbers = #tpu.dot_dimension_numbers<[2], [2], [1], [1], [0, 0, 0, 1, 1, 1], [0], [0]>} : vector<2x8x8xbf16>, vector<2x8x8xbf16>, vector<2x8x8xf32> -> vector<2x8x8xf32>
    "tpu.trace_stop"() : () -> ()
    %50 = arith.addf %49, %15 : vector<2x8x8xf32>
    %cst_17 = arith.constant dense<0xFF800000> : vector<2x8xf32>
    %51 = vector.multi_reduction <maximumf>, %50, %cst_17 [2] : vector<2x8x8xf32> to vector<2x8xf32>
    %52 = vector.shape_cast %51 : vector<2x8xf32> to vector<2x8x1xf32>
    %53 = vector.broadcast %52 : vector<2x8x1xf32> to vector<2x8x8xf32>
    %54 = arith.subf %50, %53 : vector<2x8x8xf32>
    %55 = math.exp %54 : vector<2x8x8xf32>
    %cst_18 = arith.constant dense<0.000000e+00> : vector<2x8xf32>
    %56 = vector.multi_reduction <add>, %55, %cst_18 [2] : vector<2x8x8xf32> to vector<2x8xf32>
    %57 = vector.shape_cast %56 : vector<2x8xf32> to vector<2x8x1xf32>
    %58 = arith.truncf %55 : vector<2x8x8xf32> to vector<2x8x8xbf16>
    "tpu.trace_start"() <{level = 10 : i32, message = "bqk,bkd->bqd"}> : () -> ()
    %cst_19 = arith.constant dense<0.000000e+00> : vector<2x8x8xf32>
    %59 = tpu.matmul %58, %48, %cst_19 {dimension_numbers = #tpu.dot_dimension_numbers<[2], [1], [1], [2], [0, 0, 0, 1, 1, 2], [0], [0]>} : vector<2x8x8xbf16>, vector<2x8x8xbf16>, vector<2x8x8xf32> -> vector<2x8x8xf32>
    "tpu.trace_stop"() : () -> ()
    %60 = tpu.reciprocal %57 {approx = true} : vector<2x8x1xf32> -> vector<2x8x1xf32>
    %61 = vector.broadcast %60 : vector<2x8x1xf32> to vector<2x8x8xf32>
    %62 = arith.mulf %59, %61 : vector<2x8x8xf32>
    %63 = vector.shape_cast %62 : vector<2x8x8xf32> to vector<16x8xf32>
    %64 = vector.extract_strided_slice %12 {offsets = [0, 16], sizes = [16, 8], strides = [1, 1]} : vector<16x96xf32> to vector<16x8xf32>
    %65 = vector.shape_cast %64 : vector<16x8xf32> to vector<2x8x8xf32>
    %66 = arith.truncf %65 : vector<2x8x8xf32> to vector<2x8x8xbf16>
    %67 = vector.extract_strided_slice %12 {offsets = [0, 48], sizes = [16, 8], strides = [1, 1]} : vector<16x96xf32> to vector<16x8xf32>
    %68 = vector.shape_cast %67 : vector<16x8xf32> to vector<2x8x8xf32>
    %69 = arith.truncf %68 : vector<2x8x8xf32> to vector<2x8x8xbf16>
    %70 = vector.extract_strided_slice %12 {offsets = [0, 80], sizes = [16, 8], strides = [1, 1]} : vector<16x96xf32> to vector<16x8xf32>
    %71 = vector.shape_cast %70 : vector<16x8xf32> to vector<2x8x8xf32>
    %72 = arith.truncf %71 : vector<2x8x8xf32> to vector<2x8x8xbf16>
    "tpu.trace_start"() <{level = 10 : i32, message = "bqd,bkd->bqk"}> : () -> ()
    %cst_20 = arith.constant dense<0.000000e+00> : vector<2x8x8xf32>
    %73 = tpu.matmul %66, %69, %cst_20 {dimension_numbers = #tpu.dot_dimension_numbers<[2], [2], [1], [1], [0, 0, 0, 1, 1, 1], [0], [0]>} : vector<2x8x8xbf16>, vector<2x8x8xbf16>, vector<2x8x8xf32> -> vector<2x8x8xf32>
    "tpu.trace_stop"() : () -> ()
    %74 = arith.addf %73, %15 : vector<2x8x8xf32>
    %cst_21 = arith.constant dense<0xFF800000> : vector<2x8xf32>
    %75 = vector.multi_reduction <maximumf>, %74, %cst_21 [2] : vector<2x8x8xf32> to vector<2x8xf32>
    %76 = vector.shape_cast %75 : vector<2x8xf32> to vector<2x8x1xf32>
    %77 = vector.broadcast %76 : vector<2x8x1xf32> to vector<2x8x8xf32>
    %78 = arith.subf %74, %77 : vector<2x8x8xf32>
    %79 = math.exp %78 : vector<2x8x8xf32>
    %cst_22 = arith.constant dense<0.000000e+00> : vector<2x8xf32>
    %80 = vector.multi_reduction <add>, %79, %cst_22 [2] : vector<2x8x8xf32> to vector<2x8xf32>
    %81 = vector.shape_cast %80 : vector<2x8xf32> to vector<2x8x1xf32>
    %82 = arith.truncf %79 : vector<2x8x8xf32> to vector<2x8x8xbf16>
    "tpu.trace_start"() <{level = 10 : i32, message = "bqk,bkd->bqd"}> : () -> ()
    %cst_23 = arith.constant dense<0.000000e+00> : vector<2x8x8xf32>
    %83 = tpu.matmul %82, %72, %cst_23 {dimension_numbers = #tpu.dot_dimension_numbers<[2], [1], [1], [2], [0, 0, 0, 1, 1, 2], [0], [0]>} : vector<2x8x8xbf16>, vector<2x8x8xbf16>, vector<2x8x8xf32> -> vector<2x8x8xf32>
    "tpu.trace_stop"() : () -> ()
    %84 = tpu.reciprocal %81 {approx = true} : vector<2x8x1xf32> -> vector<2x8x1xf32>
    %85 = vector.broadcast %84 : vector<2x8x1xf32> to vector<2x8x8xf32>
    %86 = arith.mulf %83, %85 : vector<2x8x8xf32>
    %87 = vector.shape_cast %86 : vector<2x8x8xf32> to vector<16x8xf32>
    %88 = vector.extract_strided_slice %12 {offsets = [0, 24], sizes = [16, 8], strides = [1, 1]} : vector<16x96xf32> to vector<16x8xf32>
    %89 = vector.shape_cast %88 : vector<16x8xf32> to vector<2x8x8xf32>
    %90 = arith.truncf %89 : vector<2x8x8xf32> to vector<2x8x8xbf16>
    %91 = vector.extract_strided_slice %12 {offsets = [0, 56], sizes = [16, 8], strides = [1, 1]} : vector<16x96xf32> to vector<16x8xf32>
    %92 = vector.shape_cast %91 : vector<16x8xf32> to vector<2x8x8xf32>
    %93 = arith.truncf %92 : vector<2x8x8xf32> to vector<2x8x8xbf16>
    %94 = vector.extract_strided_slice %12 {offsets = [0, 88], sizes = [16, 8], strides = [1, 1]} : vector<16x96xf32> to vector<16x8xf32>
    %95 = vector.shape_cast %94 : vector<16x8xf32> to vector<2x8x8xf32>
    %96 = arith.truncf %95 : vector<2x8x8xf32> to vector<2x8x8xbf16>
    "tpu.trace_start"() <{level = 10 : i32, message = "bqd,bkd->bqk"}> : () -> ()
    %cst_24 = arith.constant dense<0.000000e+00> : vector<2x8x8xf32>
    %97 = tpu.matmul %90, %93, %cst_24 {dimension_numbers = #tpu.dot_dimension_numbers<[2], [2], [1], [1], [0, 0, 0, 1, 1, 1], [0], [0]>} : vector<2x8x8xbf16>, vector<2x8x8xbf16>, vector<2x8x8xf32> -> vector<2x8x8xf32>
    "tpu.trace_stop"() : () -> ()
    %98 = arith.addf %97, %15 : vector<2x8x8xf32>
    %cst_25 = arith.constant dense<0xFF800000> : vector<2x8xf32>
    %99 = vector.multi_reduction <maximumf>, %98, %cst_25 [2] : vector<2x8x8xf32> to vector<2x8xf32>
    %100 = vector.shape_cast %99 : vector<2x8xf32> to vector<2x8x1xf32>
    %101 = vector.broadcast %100 : vector<2x8x1xf32> to vector<2x8x8xf32>
    %102 = arith.subf %98, %101 : vector<2x8x8xf32>
    %103 = math.exp %102 : vector<2x8x8xf32>
    %cst_26 = arith.constant dense<0.000000e+00> : vector<2x8xf32>
    %104 = vector.multi_reduction <add>, %103, %cst_26 [2] : vector<2x8x8xf32> to vector<2x8xf32>
    %105 = vector.shape_cast %104 : vector<2x8xf32> to vector<2x8x1xf32>
    %106 = arith.truncf %103 : vector<2x8x8xf32> to vector<2x8x8xbf16>
    "tpu.trace_start"() <{level = 10 : i32, message = "bqk,bkd->bqd"}> : () -> ()
    %cst_27 = arith.constant dense<0.000000e+00> : vector<2x8x8xf32>
    %107 = tpu.matmul %106, %96, %cst_27 {dimension_numbers = #tpu.dot_dimension_numbers<[2], [1], [1], [2], [0, 0, 0, 1, 1, 2], [0], [0]>} : vector<2x8x8xbf16>, vector<2x8x8xbf16>, vector<2x8x8xf32> -> vector<2x8x8xf32>
    "tpu.trace_stop"() : () -> ()
    %108 = tpu.reciprocal %105 {approx = true} : vector<2x8x1xf32> -> vector<2x8x1xf32>
    %109 = vector.broadcast %108 : vector<2x8x1xf32> to vector<2x8x8xf32>
    %110 = arith.mulf %107, %109 : vector<2x8x8xf32>
    %111 = vector.shape_cast %110 : vector<2x8x8xf32> to vector<16x8xf32>
    %112 = tpu.concatenate %39, %63, %87, %111 in 1 : vector<16x8xf32>, vector<16x8xf32>, vector<16x8xf32>, vector<16x8xf32> -> vector<16x32xf32>
    %113 = arith.truncf %112 : vector<16x32xf32> to vector<16x32xbf16>
    %c0_28 = arith.constant 0 : index
    %c0_29 = arith.constant 0 : index
    %c0_30 = arith.constant 0 : index
    %114 = vector.load %arg8[%c0_28, %c0_29, %c0_30] : memref<1x32x32xbf16, #tpu.memory_space<vmem>>, vector<1x32x32xbf16>
    %115 = vector.shape_cast %114 : vector<1x32x32xbf16> to vector<32x32xbf16>
    %cst_31 = arith.constant dense<0.000000e+00> : vector<16x32xf32>
    %116 = tpu.matmul %113, %115, %cst_31 {dimension_numbers = #tpu.dot_dimension_numbers<[1], [0], [0], [1], [0, 0, 1, 1], [], []>} : vector<16x32xbf16>, vector<32x32xbf16>, vector<16x32xf32> -> vector<16x32xf32>
    %c0_32 = arith.constant 0 : index
    %c0_33 = arith.constant 0 : index
    %c0_34 = arith.constant 0 : index
    %117 = vector.load %arg9[%c0_32, %c0_33, %c0_34] : memref<1x1x32xf32, #tpu.memory_space<vmem>>, vector<1x1x32xf32>
    %118 = vector.shape_cast %117 : vector<1x1x32xf32> to vector<1x32xf32>
    %119 = vector.broadcast %118 : vector<1x32xf32> to vector<16x32xf32>
    %120 = arith.addf %116, %119 : vector<16x32xf32>
    %121 = arith.addf %4, %120 : vector<16x32xf32>
    %c0_35 = arith.constant 0 : index
    %c0_36 = arith.constant 0 : index
    %c0_37 = arith.constant 0 : index
    %122 = vector.load %arg14[%c0_35, %c0_36, %c0_37] : memref<1x1x32xf32, #tpu.memory_space<vmem>>, vector<1x1x32xf32>
    %123 = vector.shape_cast %122 : vector<1x1x32xf32> to vector<1x32xf32>
    %c0_38 = arith.constant 0 : index
    %c0_39 = arith.constant 0 : index
    %c0_40 = arith.constant 0 : index
    %124 = vector.load %arg15[%c0_38, %c0_39, %c0_40] : memref<1x1x32xf32, #tpu.memory_space<vmem>>, vector<1x1x32xf32>
    %125 = vector.shape_cast %124 : vector<1x1x32xf32> to vector<1x32xf32>
    %cst_41 = arith.constant dense<0.000000e+00> : vector<16xf32>
    %126 = vector.multi_reduction <add>, %121, %cst_41 [1] : vector<16x32xf32> to vector<16xf32>
    %127 = vector.shape_cast %126 : vector<16xf32> to vector<16x1xf32>
    %cst_42 = arith.constant 3.200000e+01 : f32
    %128 = vector.broadcast %cst_42 : f32 to vector<16x1xf32>
    %129 = arith.divf %127, %128 : vector<16x1xf32>
    %130 = vector.broadcast %129 : vector<16x1xf32> to vector<16x32xf32>
    %131 = arith.subf %121, %130 : vector<16x32xf32>
    %132 = arith.mulf %131, %131 : vector<16x32xf32>
    %cst_43 = arith.constant dense<0.000000e+00> : vector<16xf32>
    %133 = vector.multi_reduction <add>, %132, %cst_43 [1] : vector<16x32xf32> to vector<16xf32>
    %134 = vector.shape_cast %133 : vector<16xf32> to vector<16x1xf32>
    %cst_44 = arith.constant 3.200000e+01 : f32
    %135 = vector.broadcast %cst_44 : f32 to vector<16x1xf32>
    %136 = arith.divf %134, %135 : vector<16x1xf32>
    %cst_45 = arith.constant 9.99999974E-6 : f32
    %137 = vector.broadcast %cst_45 : f32 to vector<16x1xf32>
    %138 = arith.addf %136, %137 : vector<16x1xf32>
    %139 = math.rsqrt %138 : vector<16x1xf32>
    %140 = vector.broadcast %139 : vector<16x1xf32> to vector<16x32xf32>
    %141 = arith.mulf %131, %140 : vector<16x32xf32>
    %142 = vector.broadcast %123 : vector<1x32xf32> to vector<16x32xf32>
    %143 = arith.mulf %141, %142 : vector<16x32xf32>
    %144 = vector.broadcast %125 : vector<1x32xf32> to vector<16x32xf32>
    %145 = arith.addf %143, %144 : vector<16x32xf32>
    %146 = arith.truncf %145 : vector<16x32xf32> to vector<16x32xbf16>
    %c0_46 = arith.constant 0 : index
    %c0_47 = arith.constant 0 : index
    %c0_48 = arith.constant 0 : index
    %147 = vector.load %arg10[%c0_46, %c0_47, %c0_48] : memref<1x32x64xbf16, #tpu.memory_space<vmem>>, vector<1x32x64xbf16>
    %148 = vector.shape_cast %147 : vector<1x32x64xbf16> to vector<32x64xbf16>
    %cst_49 = arith.constant dense<0.000000e+00> : vector<16x64xf32>
    %149 = tpu.matmul %146, %148, %cst_49 {dimension_numbers = #tpu.dot_dimension_numbers<[1], [0], [0], [1], [0, 0, 1, 1], [], []>} : vector<16x32xbf16>, vector<32x64xbf16>, vector<16x64xf32> -> vector<16x64xf32>
    %c0_50 = arith.constant 0 : index
    %c0_51 = arith.constant 0 : index
    %c0_52 = arith.constant 0 : index
    %150 = vector.load %arg11[%c0_50, %c0_51, %c0_52] : memref<1x1x64xf32, #tpu.memory_space<vmem>>, vector<1x1x64xf32>
    %151 = vector.shape_cast %150 : vector<1x1x64xf32> to vector<1x64xf32>
    %152 = vector.broadcast %151 : vector<1x64xf32> to vector<16x64xf32>
    %153 = arith.addf %149, %152 : vector<16x64xf32>
    %cst_53 = arith.constant 0.000000e+00 : f32
    %154 = vector.broadcast %cst_53 : f32 to vector<16x64xf32>
    %155 = arith.maximumf %153, %154 : vector<16x64xf32>
    %156 = arith.truncf %155 : vector<16x64xf32> to vector<16x64xbf16>
    %c0_54 = arith.constant 0 : index
    %c0_55 = arith.constant 0 : index
    %c0_56 = arith.constant 0 : index
    %157 = vector.load %arg12[%c0_54, %c0_55, %c0_56] : memref<1x64x32xbf16, #tpu.memory_space<vmem>>, vector<1x64x32xbf16>
    %158 = vector.shape_cast %157 : vector<1x64x32xbf16> to vector<64x32xbf16>
    %cst_57 = arith.constant dense<0.000000e+00> : vector<16x32xf32>
    %159 = tpu.matmul %156, %158, %cst_57 {dimension_numbers = #tpu.dot_dimension_numbers<[1], [0], [0], [1], [0, 0, 1, 1], [], []>} : vector<16x64xbf16>, vector<64x32xbf16>, vector<16x32xf32> -> vector<16x32xf32>
    %c0_58 = arith.constant 0 : index
    %c0_59 = arith.constant 0 : index
    %c0_60 = arith.constant 0 : index
    %160 = vector.load %arg13[%c0_58, %c0_59, %c0_60] : memref<1x1x32xf32, #tpu.memory_space<vmem>>, vector<1x1x32xf32>
    %161 = vector.shape_cast %160 : vector<1x1x32xf32> to vector<1x32xf32>
    %162 = vector.broadcast %161 : vector<1x32xf32> to vector<16x32xf32>
    %163 = arith.addf %159, %162 : vector<16x32xf32>
    %164 = arith.addf %145, %163 : vector<16x32xf32>
    %c0_61 = arith.constant 0 : index
    %c0_62 = arith.constant 0 : index
    %c0_63 = arith.constant 0 : index
    %165 = vector.load %arg16[%c0_61, %c0_62, %c0_63] : memref<1x1x32xf32, #tpu.memory_space<vmem>>, vector<1x1x32xf32>
    %166 = vector.shape_cast %165 : vector<1x1x32xf32> to vector<1x32xf32>
    %c0_64 = arith.constant 0 : index
    %c0_65 = arith.constant 0 : index
    %c0_66 = arith.constant 0 : index
    %167 = vector.load %arg17[%c0_64, %c0_65, %c0_66] : memref<1x1x32xf32, #tpu.memory_space<vmem>>, vector<1x1x32xf32>
    %168 = vector.shape_cast %167 : vector<1x1x32xf32> to vector<1x32xf32>
    %cst_67 = arith.constant dense<0.000000e+00> : vector<16xf32>
    %169 = vector.multi_reduction <add>, %164, %cst_67 [1] : vector<16x32xf32> to vector<16xf32>
    %170 = vector.shape_cast %169 : vector<16xf32> to vector<16x1xf32>
    %cst_68 = arith.constant 3.200000e+01 : f32
    %171 = vector.broadcast %cst_68 : f32 to vector<16x1xf32>
    %172 = arith.divf %170, %171 : vector<16x1xf32>
    %173 = vector.broadcast %172 : vector<16x1xf32> to vector<16x32xf32>
    %174 = arith.subf %164, %173 : vector<16x32xf32>
    %175 = arith.mulf %174, %174 : vector<16x32xf32>
    %cst_69 = arith.constant dense<0.000000e+00> : vector<16xf32>
    %176 = vector.multi_reduction <add>, %175, %cst_69 [1] : vector<16x32xf32> to vector<16xf32>
    %177 = vector.shape_cast %176 : vector<16xf32> to vector<16x1xf32>
    %cst_70 = arith.constant 3.200000e+01 : f32
    %178 = vector.broadcast %cst_70 : f32 to vector<16x1xf32>
    %179 = arith.divf %177, %178 : vector<16x1xf32>
    %cst_71 = arith.constant 9.99999974E-6 : f32
    %180 = vector.broadcast %cst_71 : f32 to vector<16x1xf32>
    %181 = arith.addf %179, %180 : vector<16x1xf32>
    %182 = math.rsqrt %181 : vector<16x1xf32>
    %183 = vector.broadcast %182 : vector<16x1xf32> to vector<16x32xf32>
    %184 = arith.mulf %174, %183 : vector<16x32xf32>
    %185 = vector.broadcast %166 : vector<1x32xf32> to vector<16x32xf32>
    %186 = arith.mulf %184, %185 : vector<16x32xf32>
    %187 = vector.broadcast %168 : vector<1x32xf32> to vector<16x32xf32>
    %188 = arith.addf %186, %187 : vector<16x32xf32>
    %189 = vector.shape_cast %188 : vector<16x32xf32> to vector<2x8x32xf32>
    %c0_72 = arith.constant 0 : index
    %c0_73 = arith.constant 0 : index
    %c0_74 = arith.constant 0 : index
    %190 = vector.load %arg21[%c0_72, %c0_73, %c0_74] : memref<2x8x32xf32, #tpu.memory_space<vmem>>, vector<2x8x32xf32>
    tpu.vector_store %arg21[%c0_72, %c0_73, %c0_74], %189 {strides = array<i32>} : memref<2x8x32xf32, #tpu.memory_space<vmem>>, vector<2x8x32xf32>,
    %c1_i32 = arith.constant 1 : i32
    %191 = arith.cmpi eq, %arg1, %c1_i32 : i32
    %192 = arith.extui %191 : i1 to i32
    %c0_i32_75 = arith.constant 0 : i32
    %193 = arith.cmpi ne, %192, %c0_i32_75 : i32
    scf.if %193 {
      %194 = vector.shape_cast %188 : vector<16x32xf32> to vector<2x8x32xf32>
      %cst_76 = arith.constant dense<0.000000e+00> : vector<2x32xf32>
      %195 = vector.multi_reduction <add>, %194, %cst_76 [1] : vector<2x8x32xf32> to vector<2x32xf32>
      %cst_77 = arith.constant 8.000000e+00 : f32
      %196 = vector.broadcast %cst_77 : f32 to vector<2x32xf32>
      %197 = arith.divf %195, %196 : vector<2x32xf32>
      %c0_78 = arith.constant 0 : index
      %c0_79 = arith.constant 0 : index
      %198 = vector.load %arg18[%c0_78, %c0_79] : memref<1x32xf32, #tpu.memory_space<vmem>>, vector<1x32xf32>
      %199 = vector.broadcast %198 : vector<1x32xf32> to vector<2x32xf32>
      %200 = arith.mulf %197, %199 : vector<2x32xf32>
      %cst_80 = arith.constant dense<0.000000e+00> : vector<2xf32>
      %201 = vector.multi_reduction <add>, %200, %cst_80 [1] : vector<2x32xf32> to vector<2xf32>
      %202 = vector.shape_cast %201 : vector<2xf32> to vector<2x1xf32>
      %c0_81 = arith.constant 0 : index
      %c0_82 = arith.constant 0 : index
      %203 = vector.load %arg19[%c0_81, %c0_82] : memref<1x1xf32, #tpu.memory_space<vmem>>, vector<1x1xf32>
      %204 = vector.broadcast %203 : vector<1x1xf32> to vector<2x1xf32>
      %205 = arith.addf %202, %204 : vector<2x1xf32>
      %c0_83 = arith.constant 0 : index
      %c0_84 = arith.constant 0 : index
      %c0_85 = arith.constant 0 : index
      %206 = vector.load %arg20[%c0_83, %c0_84, %c0_85] : memref<1x2x1xf32, #tpu.memory_space<vmem>>, vector<1x2x1xf32>
      %207 = vector.shape_cast %206 : vector<1x2x1xf32> to vector<2x1xf32>
      %208 = vector.shape_cast %205 : vector<2x1xf32> to vector<1x2x1xf32>
      tpu.vector_store %arg20[%c0_83, %c0_84, %c0_85], %208 {strides = array<i32>} : memref<1x2x1xf32, #tpu.memory_space<vmem>>, vector<1x2x1xf32>,
    } else {
    }
    return
  }
  func.func @transform_0(%arg0: i32, %arg1: i32) -> (i32, i32, i32) {
    %c0_i32 = arith.constant 0 : i32
    %c0_i32_0 = arith.constant 0 : i32
    %c0_i32_1 = arith.constant 0 : i32
    return %arg0, %c0_i32, %c0_i32_0 : i32, i32, i32
  }
  func.func @transform_1(%arg0: i32, %arg1: i32) -> (i32, i32) {
    %c0_i32 = arith.constant 0 : i32
    %c0_i32_0 = arith.constant 0 : i32
    %c0_i32_1 = arith.constant 0 : i32
    return %c0_i32, %c0_i32_0 : i32, i32
  }
  func.func @transform_2(%arg0: i32, %arg1: i32) -> (i32, i32) {
    %c0_i32 = arith.constant 0 : i32
    %c0_i32_0 = arith.constant 0 : i32
    %c0_i32_1 = arith.constant 0 : i32
    return %c0_i32, %c0_i32_0 : i32, i32
  }
  func.func @transform_3(%arg0: i32, %arg1: i32) -> (i32, i32) {
    %c0_i32 = arith.constant 0 : i32
    %c0_i32_0 = arith.constant 0 : i32
    %c0_i32_1 = arith.constant 0 : i32
    return %c0_i32, %c0_i32_0 : i32, i32
  }
  func.func @transform_4(%arg0: i32, %arg1: i32) -> (i32, i32, i32) {
    %c0_i32 = arith.constant 0 : i32
    %c0_i32_0 = arith.constant 0 : i32
    %c0_i32_1 = arith.constant 0 : i32
    return %arg1, %c0_i32, %c0_i32_0 : i32, i32, i32
  }
  func.func @transform_5(%arg0: i32, %arg1: i32) -> (i32, i32, i32) {
    %c0_i32 = arith.constant 0 : i32
    %c0_i32_0 = arith.constant 0 : i32
    %c0_i32_1 = arith.constant 0 : i32
    return %arg1, %c0_i32, %c0_i32_0 : i32, i32, i32
  }
  func.func @transform_6(%arg0: i32, %arg1: i32) -> (i32, i32, i32) {
    %c0_i32 = arith.constant 0 : i32
    %c0_i32_0 = arith.constant 0 : i32
    %c0_i32_1 = arith.constant 0 : i32
    return %arg1, %c0_i32, %c0_i32_0 : i32, i32, i32
  }
  func.func @transform_7(%arg0: i32, %arg1: i32) -> (i32, i32, i32) {
    %c0_i32 = arith.constant 0 : i32
    %c0_i32_0 = arith.constant 0 : i32
    %c0_i32_1 = arith.constant 0 : i32
    return %arg1, %c0_i32, %c0_i32_0 : i32, i32, i32
  }
  func.func @transform_8(%arg0: i32, %arg1: i32) -> (i32, i32, i32) {
    %c0_i32 = arith.constant 0 : i32
    %c0_i32_0 = arith.constant 0 : i32
    %c0_i32_1 = arith.constant 0 : i32
    return %arg1, %c0_i32, %c0_i32_0 : i32, i32, i32
  }
  func.func @transform_9(%arg0: i32, %arg1: i32) -> (i32, i32, i32) {
    %c0_i32 = arith.constant 0 : i32
    %c0_i32_0 = arith.constant 0 : i32
    %c0_i32_1 = arith.constant 0 : i32
    return %arg1, %c0_i32, %c0_i32_0 : i32, i32, i32
  }
  func.func @transform_10(%arg0: i32, %arg1: i32) -> (i32, i32, i32) {
    %c0_i32 = arith.constant 0 : i32
    %c0_i32_0 = arith.constant 0 : i32
    %c0_i32_1 = arith.constant 0 : i32
    return %arg1, %c0_i32, %c0_i32_0 : i32, i32, i32
  }
  func.func @transform_11(%arg0: i32, %arg1: i32) -> (i32, i32, i32) {
    %c0_i32 = arith.constant 0 : i32
    %c0_i32_0 = arith.constant 0 : i32
    %c0_i32_1 = arith.constant 0 : i32
    return %arg1, %c0_i32, %c0_i32_0 : i32, i32, i32
  }
  func.func @transform_12(%arg0: i32, %arg1: i32) -> (i32, i32, i32) {
    %c0_i32 = arith.constant 0 : i32
    %c0_i32_0 = arith.constant 0 : i32
    %c0_i32_1 = arith.constant 0 : i32
    return %arg1, %c0_i32, %c0_i32_0 : i32, i32, i32
  }
  func.func @transform_13(%arg0: i32, %arg1: i32) -> (i32, i32, i32) {
    %c0_i32 = arith.constant 0 : i32
    %c0_i32_0 = arith.constant 0 : i32
    %c0_i32_1 = arith.constant 0 : i32
    return %arg1, %c0_i32, %c0_i32_0 : i32, i32, i32
  }
  func.func @transform_14(%arg0: i32, %arg1: i32) -> (i32, i32, i32) {
    %c0_i32 = arith.constant 0 : i32
    %c0_i32_0 = arith.constant 0 : i32
    %c0_i32_1 = arith.constant 0 : i32
    return %arg1, %c0_i32, %c0_i32_0 : i32, i32, i32
  }
  func.func @transform_15(%arg0: i32, %arg1: i32) -> (i32, i32, i32) {
    %c0_i32 = arith.constant 0 : i32
    %c0_i32_0 = arith.constant 0 : i32
    %c0_i32_1 = arith.constant 0 : i32
    return %arg1, %c0_i32, %c0_i32_0 : i32, i32, i32
  }
  func.func @transform_16(%arg0: i32, %arg1: i32) -> (i32, i32) {
    %c0_i32 = arith.constant 0 : i32
    %c0_i32_0 = arith.constant 0 : i32
    %c0_i32_1 = arith.constant 0 : i32
    return %c0_i32, %c0_i32_0 : i32, i32
  }
  func.func @transform_17(%arg0: i32, %arg1: i32) -> (i32, i32) {
    %c0_i32 = arith.constant 0 : i32
    %c0_i32_0 = arith.constant 0 : i32
    %c0_i32_1 = arith.constant 0 : i32
    return %c0_i32, %c0_i32_0 : i32, i32
  }
  func.func @transform_18(%arg0: i32, %arg1: i32) -> (i32, i32, i32) {
    %c0_i32 = arith.constant 0 : i32
    %c0_i32_0 = arith.constant 0 : i32
    %c0_i32_1 = arith.constant 0 : i32
    return %arg0, %c0_i32, %c0_i32_0 : i32, i32, i32
  }
}

</mosaic_0001>

<llo_original>
// kernel: tpu_custom_call.1
$region0: #{tpu_custom_call.1}
  #allocation0 [shape = 'u32[]', space=smem, size = 0x4, offset = 0x4, fixed_abs, tag = 'smem constant byte address 0x4 - core index']
  #allocation1 [shape = 'u32[144,128]{1,0:T(1,128)}', space=vmem, size = 0x12000, scoped, tag = 'internal scratch']
  #allocation2 [shape = 'f32[2,8,32]{2,1,0:T(8,128)}', space=vmem, size = 0x2000, scoped, tag = 'scratch operand']
  #allocation3 [shape = 'f32[2,1,8]{2,1,0:T(1,128)}', space=vmem, size = 0x400, scoped, tag = 'scratch operand']
  #allocation4 [shape = 'f32[1,1]{1,0:T(1,128)S(1)}', space=vmem, size = 0x200, scoped, tag = 'scoped memory for tpu_custom_call.1']
  %s0 = inlined_call_operand.hbm [shape: f32[2,8,16], index: 0, kind: input, shape index: {}]
  %s1 = inlined_call_operand.hbm [shape: f32[8,32], index: 1, kind: input, shape index: {}]
  %s2 = inlined_call_operand.hbm [shape: bf16[16,32], index: 2, kind: input, shape index: {}]
  %s3 = inlined_call_operand.hbm [shape: f32[1,32], index: 3, kind: input, shape index: {}]
  %s4 = inlined_call_operand.vmem [shape: bf16[2,32,96], index: 4, kind: input, shape index: {}]
  %s5 = inlined_call_operand.vmem [shape: f32[2,1,96], index: 5, kind: input, shape index: {}]
  %s6 = inlined_call_operand.vmem [shape: bf16[2,32,32], index: 6, kind: input, shape index: {}]
  %s7 = inlined_call_operand.vmem [shape: f32[2,1,32], index: 7, kind: input, shape index: {}]
  %s8 = inlined_call_operand.vmem [shape: bf16[2,32,64], index: 8, kind: input, shape index: {}]
  %s9 = inlined_call_operand.vmem [shape: f32[2,1,64], index: 9, kind: input, shape index: {}]
  %s10 = inlined_call_operand.vmem [shape: bf16[2,64,32], index: 10, kind: input, shape index: {}]
  %s11 = inlined_call_operand.vmem [shape: f32[2,1,32], index: 11, kind: input, shape index: {}]
  %s12 = inlined_call_operand.vmem [shape: f32[2,1,32], index: 12, kind: input, shape index: {}]
  %s13 = inlined_call_operand.vmem [shape: f32[2,1,32], index: 13, kind: input, shape index: {}]
  %s14 = inlined_call_operand.vmem [shape: f32[2,1,32], index: 14, kind: input, shape index: {}]
  %s15 = inlined_call_operand.vmem [shape: f32[2,1,32], index: 15, kind: input, shape index: {}]
  %s16 = inlined_call_operand.vmem [shape: f32[1,32], index: 16, kind: input, shape index: {}]
  %s17 = inlined_call_operand.<no memory space> [shape: f32[1,1], index: 17, kind: input, shape index: {}]
  %s18 = inlined_call_operand.vmem [shape: f32[1,2,1], index: 18, kind: output, shape index: {}]
  %s19 = sld [smem:[#allocation0]]
  $region129: #{tpu_custom_call.1} parent=0
    _
  %s21 = ssub.s32 1, %s19
  %s22 = scalar_select 0, %s21, %s19
  %v23 = vstv %s17
  %24 = vst [vmem:[#allocation4] sm:$0x1] %v23
  $region1: #{tpu_custom_call.1} parent=0
    #allocation5 [shape = 'u8[8192]{0}', space=vmem, size = 0x2000, scoped, tag = 'input window, operand 0, single buffered']
    #allocation6 [shape = 's32[2]{0}', space=sflag, size = 0x8, scoped, tag = 'scoped memory for tpu_custom_call.1']
    #allocation7 [shape = 'u8[4096]{0}', space=vmem, size = 0x1000, scoped, tag = 'input window, operand 1, single buffered']
    #allocation8 [shape = 's32[1]{0}', space=sflag, size = 0x4, scoped, tag = 'scoped memory for tpu_custom_call.1']
    #allocation9 [shape = 'u8[4096]{0}', space=vmem, size = 0x1000, scoped, tag = 'input window, operand 2, single buffered']
    #allocation10 [shape = 'u8[512]{0}', space=vmem, size = 0x400, scoped, tag = 'input window, operand 3, single buffered']
    #allocation11 [shape = 's32[1]{0}', space=sflag, size = 0x4, scoped, tag = 'scoped memory for tpu_custom_call.1']
    %25 = vsyncpa [#allocation6], 0
    %26 = vsyncpa [#allocation8], 0
    %27 = vsyncpa [#allocation11], 0
    loop: start=0, step=1, limit=4
    $region2: #{tpu_custom_call.1} parent=1 // loop_pre_header
      _
    $region3: #{tpu_custom_call.1} parent=1 // loop_header
      %s29 = sphi 0, %s33
      %p30 = scmp.ge.s32.totalorder %s29, 4
      %s36 = sphi 0, %s48
      %s37 = sphi 0, %s44
      %s38 = sphi 0, %s36
      %s39 = sphi 0, %s37
      %s40 = sphi 0, %s38
      %s41 = sphi 0, %s39
      %s51 = sphi 0, %s53
      %s54 = sphi 0, %s51
      %s55 = sphi 0, %s54
      %s71 = sphi 0, %s55
      %s75 = sphi 0, %s75
      %s77 = sphi 0, %s75
      %s78 = sphi 0, %s77
      %s92 = sphi 0, %s78
      %s96 = sphi 0, %s96
      %s98 = sphi 0, %s96
      %s99 = sphi 0, %s98
      %s113 = sphi 0, %s99
      %s117 = sphi 0, %s117
      %s119 = sphi 0, %s117
      %s120 = sphi 0, %s119
      %s134 = sphi 0, %s120
      %s140 = sphi 0, %s142
      %s143 = sphi 0, %s140
      %s144 = sphi 0, %s143
      %s160 = sphi 0, %s144
      %s166 = sphi 0, %s168
      %s169 = sphi 0, %s166
      %s170 = sphi 0, %s169
      %s186 = sphi 0, %s170
      %s192 = sphi 0, %s194
      %s195 = sphi 0, %s192
      %s196 = sphi 0, %s195
      %s212 = sphi 0, %s196
      %s218 = sphi 0, %s220
      %s221 = sphi 0, %s218
      %s222 = sphi 0, %s221
      %s238 = sphi 0, %s222
      %s244 = sphi 0, %s246
      %s247 = sphi 0, %s244
      %s248 = sphi 0, %s247
      %s264 = sphi 0, %s248
      %s270 = sphi 0, %s272
      %s273 = sphi 0, %s270
      %s274 = sphi 0, %s273
      %s290 = sphi 0, %s274
      %s296 = sphi 0, %s298
      %s299 = sphi 0, %s296
      %s300 = sphi 0, %s299
      %s316 = sphi 0, %s300
      %s322 = sphi 0, %s324
      %s325 = sphi 0, %s322
      %s326 = sphi 0, %s325
      %s342 = sphi 0, %s326
      %s348 = sphi 0, %s350
      %s351 = sphi 0, %s348
      %s352 = sphi 0, %s351
      %s368 = sphi 0, %s352
      %s374 = sphi 0, %s376
      %s377 = sphi 0, %s374
      %s378 = sphi 0, %s377
      %s394 = sphi 0, %s378
      %s400 = sphi 0, %s402
      %s403 = sphi 0, %s400
      %s404 = sphi 0, %s403
      %s420 = sphi 0, %s404
      %s426 = sphi 0, %s428
      %s429 = sphi 0, %s426
      %s430 = sphi 0, %s429
      %s446 = sphi 0, %s430
      %s450 = sphi 0, %s450
      %s452 = sphi 0, %s450
      %s453 = sphi 0, %s452
      %s467 = sphi 0, %s453
      %s471 = sphi 0, %s471
      %s473 = sphi 0, %s471
      %s474 = sphi 0, %s473
      %s488 = sphi 0, %s474
      %s494 = sphi 0, %s496
      %s497 = sphi 0, %s494
      %s498 = sphi 0, %s497
      %s514 = sphi 0, %s498
    $region4: #{tpu_custom_call.1} parent=1 // loop_header_branch
      %32 = sbr.rel (%p30) target = $region8
    $region5: #{tpu_custom_call.1} parent=1 // loop_body
      %s34 = ssub.s32 %s29, 1
      %s35 = ssub.s32 %s29, 2
      %s42 = sadd.s32 1, %s37
      %p43 = scmp.ge.s32.totalorder %s42, 2
      %s44 = scalar_select %p43, 0, %s42
      %s45 = sadd.s32 1, %s36
      %s46 = scalar_select %p43, %s45, %s36
      %p47 = scmp.ge.s32.totalorder %s46, 1
      %s48 = scalar_select %p47, 0, %s46
      %s49 = ssub.s32 %s36, %s48
      %p50 = scmp.eq.s32.totalorder %s49, 0
      %s52 = sadd.s32 %s51, 1
      %s53 = scalar_select %p50, %s51, %s52
      %p56 = pneg %p50
      %p57 = scmp.eq.s32.totalorder %s29, 1
      %p58 = por %p56, %p57
      %p59 = scmp.ne.s32.totalorder %s51, %s54
      %p60 = scmp.eq.s32.totalorder %s29, 0
      %p61 = por %p59, %p60
      %p62 = scmp.ne.s32.totalorder %s51, %s54
      %p63 = scmp.eq.s32.totalorder %s34, 1
      %p64 = por %p62, %p63
      %p65 = scmp.ne.s32.totalorder %s54, %s55
      %p66 = scmp.eq.s32.totalorder %s34, 0
      %p67 = por %p65, %p66
      %p68 = scmp.ne.s32.totalorder %s54, %s55
      %p69 = scmp.eq.s32.totalorder %s35, 1
      %p70 = por %p68, %p69
      %p72 = scmp.ne.s32.totalorder %s55, %s71
      %p73 = scmp.eq.s32.totalorder %s35, 0
      %p74 = por %p72, %p73
      %s76 = sadd.s32 %s75, 1
      %p79 = scmp.eq.s32.totalorder %s29, 1
      %p80 = scmp.ne.s32.totalorder %s75, %s77
      %p81 = scmp.eq.s32.totalorder %s29, 0
      %p82 = por %p80, %p81
      %p83 = scmp.ne.s32.totalorder %s75, %s77
      %p84 = scmp.eq.s32.totalorder %s34, 1
      %p85 = por %p83, %p84
      %p86 = scmp.ne.s32.totalorder %s77, %s78
      %p87 = scmp.eq.s32.totalorder %s34, 0
      %p88 = por %p86, %p87
      %p89 = scmp.ne.s32.totalorder %s77, %s78
      %p90 = scmp.eq.s32.totalorder %s35, 1
      %p91 = por %p89, %p90
      %p93 = scmp.ne.s32.totalorder %s78, %s92
      %p94 = scmp.eq.s32.totalorder %s35, 0
      %p95 = por %p93, %p94
      %s97 = sadd.s32 %s96, 1
      %p100 = scmp.eq.s32.totalorder %s29, 1
      %p101 = scmp.ne.s32.totalorder %s96, %s98
      %p102 = scmp.eq.s32.totalorder %s29, 0
      %p103 = por %p101, %p102
      %p104 = scmp.ne.s32.totalorder %s96, %s98
      %p105 = scmp.eq.s32.totalorder %s34, 1
      %p106 = por %p104, %p105
      %p107 = scmp.ne.s32.totalorder %s98, %s99
      %p108 = scmp.eq.s32.totalorder %s34, 0
      %p109 = por %p107, %p108
      %p110 = scmp.ne.s32.totalorder %s98, %s99
      %p111 = scmp.eq.s32.totalorder %s35, 1
      %p112 = por %p110, %p111
      %p114 = scmp.ne.s32.totalorder %s99, %s113
      %p115 = scmp.eq.s32.totalorder %s35, 0
      %p116 = por %p114, %p115
      %s118 = sadd.s32 %s117, 1
      %p121 = scmp.eq.s32.totalorder %s29, 1
      %p122 = scmp.ne.s32.totalorder %s117, %s119
      %p123 = scmp.eq.s32.totalorder %s29, 0
      %p124 = por %p122, %p123
      %p125 = scmp.ne.s32.totalorder %s117, %s119
      %p126 = scmp.eq.s32.totalorder %s34, 1
      %p127 = por %p125, %p126
      %p128 = scmp.ne.s32.totalorder %s119, %s120
      %p129 = scmp.eq.s32.totalorder %s34, 0
      %p130 = por %p128, %p129
      %p131 = scmp.ne.s32.totalorder %s119, %s120
      %p132 = scmp.eq.s32.totalorder %s35, 1
      %p133 = por %p131, %p132
      %p135 = scmp.ne.s32.totalorder %s120, %s134
      %p136 = scmp.eq.s32.totalorder %s35, 0
      %p137 = por %p135, %p136
      %s138 = ssub.s32 %s37, %s44
      %p139 = scmp.eq.s32.totalorder %s138, 0
      %s141 = sadd.s32 %s140, 1
      %s142 = scalar_select %p139, %s140, %s141
      %p145 = pneg %p139
      %p146 = scmp.eq.s32.totalorder %s29, 1
      %p147 = por %p145, %p146
      %p148 = scmp.ne.s32.totalorder %s140, %s143
      %p149 = scmp.eq.s32.totalorder %s29, 0
      %p150 = por %p148, %p149
      %p151 = scmp.ne.s32.totalorder %s140, %s143
      %p152 = scmp.eq.s32.totalorder %s34, 1
      %p153 = por %p151, %p152
      %p154 = scmp.ne.s32.totalorder %s143, %s144
      %p155 = scmp.eq.s32.totalorder %s34, 0
      %p156 = por %p154, %p155
      %p157 = scmp.ne.s32.totalorder %s143, %s144
      %p158 = scmp.eq.s32.totalorder %s35, 1
      %p159 = por %p157, %p158
      %p161 = scmp.ne.s32.totalorder %s144, %s160
      %p162 = scmp.eq.s32.totalorder %s35, 0
      %p163 = por %p161, %p162
      %s164 = ssub.s32 %s37, %s44
      %p165 = scmp.eq.s32.totalorder %s164, 0
      %s167 = sadd.s32 %s166, 1
      %s168 = scalar_select %p165, %s166, %s167
      %p171 = pneg %p165
      %p172 = scmp.eq.s32.totalorder %s29, 1
      %p173 = por %p171, %p172
      %p174 = scmp.ne.s32.totalorder %s166, %s169
      %p175 = scmp.eq.s32.totalorder %s29, 0
      %p176 = por %p174, %p175
      %p177 = scmp.ne.s32.totalorder %s166, %s169
      %p178 = scmp.eq.s32.totalorder %s34, 1
      %p179 = por %p177, %p178
      %p180 = scmp.ne.s32.totalorder %s169, %s170
      %p181 = scmp.eq.s32.totalorder %s34, 0
      %p182 = por %p180, %p181
      %p183 = scmp.ne.s32.totalorder %s169, %s170
      %p184 = scmp.eq.s32.totalorder %s35, 1
      %p185 = por %p183, %p184
      %p187 = scmp.ne.s32.totalorder %s170, %s186
      %p188 = scmp.eq.s32.totalorder %s35, 0
      %p189 = por %p187, %p188
      %s190 = ssub.s32 %s37, %s44
      %p191 = scmp.eq.s32.totalorder %s190, 0
      %s193 = sadd.s32 %s192, 1
      %s194 = scalar_select %p191, %s192, %s193
      %p197 = pneg %p191
      %p198 = scmp.eq.s32.totalorder %s29, 1
      %p199 = por %p197, %p198
      %p200 = scmp.ne.s32.totalorder %s192, %s195
      %p201 = scmp.eq.s32.totalorder %s29, 0
      %p202 = por %p200, %p201
      %p203 = scmp.ne.s32.totalorder %s192, %s195
      %p204 = scmp.eq.s32.totalorder %s34, 1
      %p205 = por %p203, %p204
      %p206 = scmp.ne.s32.totalorder %s195, %s196
      %p207 = scmp.eq.s32.totalorder %s34, 0
      %p208 = por %p206, %p207
      %p209 = scmp.ne.s32.totalorder %s195, %s196
      %p210 = scmp.eq.s32.totalorder %s35, 1
      %p211 = por %p209, %p210
      %p213 = scmp.ne.s32.totalorder %s196, %s212
      %p214 = scmp.eq.s32.totalorder %s35, 0
      %p215 = por %p213, %p214
      %s216 = ssub.s32 %s37, %s44
      %p217 = scmp.eq.s32.totalorder %s216, 0
      %s219 = sadd.s32 %s218, 1
      %s220 = scalar_select %p217, %s218, %s219
      %p223 = pneg %p217
      %p224 = scmp.eq.s32.totalorder %s29, 1
      %p225 = por %p223, %p224
      %p226 = scmp.ne.s32.totalorder %s218, %s221
      %p227 = scmp.eq.s32.totalorder %s29, 0
      %p228 = por %p226, %p227
      %p229 = scmp.ne.s32.totalorder %s218, %s221
      %p230 = scmp.eq.s32.totalorder %s34, 1
      %p231 = por %p229, %p230
      %p232 = scmp.ne.s32.totalorder %s221, %s222
      %p233 = scmp.eq.s32.totalorder %s34, 0
      %p234 = por %p232, %p233
      %p235 = scmp.ne.s32.totalorder %s221, %s222
      %p236 = scmp.eq.s32.totalorder %s35, 1
      %p237 = por %p235, %p236
      %p239 = scmp.ne.s32.totalorder %s222, %s238
      %p240 = scmp.eq.s32.totalorder %s35, 0
      %p241 = por %p239, %p240
      %s242 = ssub.s32 %s37, %s44
      %p243 = scmp.eq.s32.totalorder %s242, 0
      %s245 = sadd.s32 %s244, 1
      %s246 = scalar_select %p243, %s244, %s245
      %p249 = pneg %p243
      %p250 = scmp.eq.s32.totalorder %s29, 1
      %p251 = por %p249, %p250
      %p252 = scmp.ne.s32.totalorder %s244, %s247
      %p253 = scmp.eq.s32.totalorder %s29, 0
      %p254 = por %p252, %p253
      %p255 = scmp.ne.s32.totalorder %s244, %s247
      %p256 = scmp.eq.s32.totalorder %s34, 1
      %p257 = por %p255, %p256
      %p258 = scmp.ne.s32.totalorder %s247, %s248
      %p259 = scmp.eq.s32.totalorder %s34, 0
      %p260 = por %p258, %p259
      %p261 = scmp.ne.s32.totalorder %s247, %s248
      %p262 = scmp.eq.s32.totalorder %s35, 1
      %p263 = por %p261, %p262
      %p265 = scmp.ne.s32.totalorder %s248, %s264
      %p266 = scmp.eq.s32.totalorder %s35, 0
      %p267 = por %p265, %p266
      %s268 = ssub.s32 %s37, %s44
      %p269 = scmp.eq.s32.totalorder %s268, 0
      %s271 = sadd.s32 %s270, 1
      %s272 = scalar_select %p269, %s270, %s271
      %p275 = pneg %p269
      %p276 = scmp.eq.s32.totalorder %s29, 1
      %p277 = por %p275, %p276
      %p278 = scmp.ne.s32.totalorder %s270, %s273
      %p279 = scmp.eq.s32.totalorder %s29, 0
      %p280 = por %p278, %p279
      %p281 = scmp.ne.s32.totalorder %s270, %s273
      %p282 = scmp.eq.s32.totalorder %s34, 1
      %p283 = por %p281, %p282
      %p284 = scmp.ne.s32.totalorder %s273, %s274
      %p285 = scmp.eq.s32.totalorder %s34, 0
      %p286 = por %p284, %p285
      %p287 = scmp.ne.s32.totalorder %s273, %s274
      %p288 = scmp.eq.s32.totalorder %s35, 1
      %p289 = por %p287, %p288
      %p291 = scmp.ne.s32.totalorder %s274, %s290
      %p292 = scmp.eq.s32.totalorder %s35, 0
      %p293 = por %p291, %p292
      %s294 = ssub.s32 %s37, %s44
      %p295 = scmp.eq.s32.totalorder %s294, 0
      %s297 = sadd.s32 %s296, 1
      %s298 = scalar_select %p295, %s296, %s297
      %p301 = pneg %p295
      %p302 = scmp.eq.s32.totalorder %s29, 1
      %p303 = por %p301, %p302
      %p304 = scmp.ne.s32.totalorder %s296, %s299
      %p305 = scmp.eq.s32.totalorder %s29, 0
      %p306 = por %p304, %p305
      %p307 = scmp.ne.s32.totalorder %s296, %s299
      %p308 = scmp.eq.s32.totalorder %s34, 1
      %p309 = por %p307, %p308
      %p310 = scmp.ne.s32.totalorder %s299, %s300
      %p311 = scmp.eq.s32.totalorder %s34, 0
      %p312 = por %p310, %p311
      %p313 = scmp.ne.s32.totalorder %s299, %s300
      %p314 = scmp.eq.s32.totalorder %s35, 1
      %p315 = por %p313, %p314
      %p317 = scmp.ne.s32.totalorder %s300, %s316
      %p318 = scmp.eq.s32.totalorder %s35, 0
      %p319 = por %p317, %p318
      %s320 = ssub.s32 %s37, %s44
      %p321 = scmp.eq.s32.totalorder %s320, 0
      %s323 = sadd.s32 %s322, 1
      %s324 = scalar_select %p321, %s322, %s323
      %p327 = pneg %p321
      %p328 = scmp.eq.s32.totalorder %s29, 1
      %p329 = por %p327, %p328
      %p330 = scmp.ne.s32.totalorder %s322, %s325
      %p331 = scmp.eq.s32.totalorder %s29, 0
      %p332 = por %p330, %p331
      %p333 = scmp.ne.s32.totalorder %s322, %s325
      %p334 = scmp.eq.s32.totalorder %s34, 1
      %p335 = por %p333, %p334
      %p336 = scmp.ne.s32.totalorder %s325, %s326
      %p337 = scmp.eq.s32.totalorder %s34, 0
      %p338 = por %p336, %p337
      %p339 = scmp.ne.s32.totalorder %s325, %s326
      %p340 = scmp.eq.s32.totalorder %s35, 1
      %p341 = por %p339, %p340
      %p343 = scmp.ne.s32.totalorder %s326, %s342
      %p344 = scmp.eq.s32.totalorder %s35, 0
      %p345 = por %p343, %p344
      %s346 = ssub.s32 %s37, %s44
      %p347 = scmp.eq.s32.totalorder %s346, 0
      %s349 = sadd.s32 %s348, 1
      %s350 = scalar_select %p347, %s348, %s349
      %p353 = pneg %p347
      %p354 = scmp.eq.s32.totalorder %s29, 1
      %p355 = por %p353, %p354
      %p356 = scmp.ne.s32.totalorder %s348, %s351
      %p357 = scmp.eq.s32.totalorder %s29, 0
      %p358 = por %p356, %p357
      %p359 = scmp.ne.s32.totalorder %s348, %s351
      %p360 = scmp.eq.s32.totalorder %s34, 1
      %p361 = por %p359, %p360
      %p362 = scmp.ne.s32.totalorder %s351, %s352
      %p363 = scmp.eq.s32.totalorder %s34, 0
      %p364 = por %p362, %p363
      %p365 = scmp.ne.s32.totalorder %s351, %s352
      %p366 = scmp.eq.s32.totalorder %s35, 1
      %p367 = por %p365, %p366
      %p369 = scmp.ne.s32.totalorder %s352, %s368
      %p370 = scmp.eq.s32.totalorder %s35, 0
      %p371 = por %p369, %p370
      %s372 = ssub.s32 %s37, %s44
      %p373 = scmp.eq.s32.totalorder %s372, 0
      %s375 = sadd.s32 %s374, 1
      %s376 = scalar_select %p373, %s374, %s375
      %p379 = pneg %p373
      %p380 = scmp.eq.s32.totalorder %s29, 1
      %p381 = por %p379, %p380
      %p382 = scmp.ne.s32.totalorder %s374, %s377
      %p383 = scmp.eq.s32.totalorder %s29, 0
      %p384 = por %p382, %p383
      %p385 = scmp.ne.s32.totalorder %s374, %s377
      %p386 = scmp.eq.s32.totalorder %s34, 1
      %p387 = por %p385, %p386
      %p388 = scmp.ne.s32.totalorder %s377, %s378
      %p389 = scmp.eq.s32.totalorder %s34, 0
      %p390 = por %p388, %p389
      %p391 = scmp.ne.s32.totalorder %s377, %s378
      %p392 = scmp.eq.s32.totalorder %s35, 1
      %p393 = por %p391, %p392
      %p395 = scmp.ne.s32.totalorder %s378, %s394
      %p396 = scmp.eq.s32.totalorder %s35, 0
      %p397 = por %p395, %p396
      %s398 = ssub.s32 %s37, %s44
      %p399 = scmp.eq.s32.totalorder %s398, 0
      %s401 = sadd.s32 %s400, 1
      %s402 = scalar_select %p399, %s400, %s401
      %p405 = pneg %p399
      %p406 = scmp.eq.s32.totalorder %s29, 1
      %p407 = por %p405, %p406
      %p408 = scmp.ne.s32.totalorder %s400, %s403
      %p409 = scmp.eq.s32.totalorder %s29, 0
      %p410 = por %p408, %p409
      %p411 = scmp.ne.s32.totalorder %s400, %s403
      %p412 = scmp.eq.s32.totalorder %s34, 1
      %p413 = por %p411, %p412
      %p414 = scmp.ne.s32.totalorder %s403, %s404
      %p415 = scmp.eq.s32.totalorder %s34, 0
      %p416 = por %p414, %p415
      %p417 = scmp.ne.s32.totalorder %s403, %s404
      %p418 = scmp.eq.s32.totalorder %s35, 1
      %p419 = por %p417, %p418
      %p421 = scmp.ne.s32.totalorder %s404, %s420
      %p422 = scmp.eq.s32.totalorder %s35, 0
      %p423 = por %p421, %p422
      %s424 = ssub.s32 %s37, %s44
      %p425 = scmp.eq.s32.totalorder %s424, 0
      %s427 = sadd.s32 %s426, 1
      %s428 = scalar_select %p425, %s426, %s427
      %p431 = pneg %p425
      %p432 = scmp.eq.s32.totalorder %s29, 1
      %p433 = por %p431, %p432
      %p434 = scmp.ne.s32.totalorder %s426, %s429
      %p435 = scmp.eq.s32.totalorder %s29, 0
      %p436 = por %p434, %p435
      %p437 = scmp.ne.s32.totalorder %s426, %s429
      %p438 = scmp.eq.s32.totalorder %s34, 1
      %p439 = por %p437, %p438
      %p440 = scmp.ne.s32.totalorder %s429, %s430
      %p441 = scmp.eq.s32.totalorder %s34, 0
      %p442 = por %p440, %p441
      %p443 = scmp.ne.s32.totalorder %s429, %s430
      %p444 = scmp.eq.s32.totalorder %s35, 1
      %p445 = por %p443, %p444
      %p447 = scmp.ne.s32.totalorder %s430, %s446
      %p448 = scmp.eq.s32.totalorder %s35, 0
      %p449 = por %p447, %p448
      %s451 = sadd.s32 %s450, 1
      %p454 = scmp.eq.s32.totalorder %s29, 1
      %p455 = scmp.ne.s32.totalorder %s450, %s452
      %p456 = scmp.eq.s32.totalorder %s29, 0
      %p457 = por %p455, %p456
      %p458 = scmp.ne.s32.totalorder %s450, %s452
      %p459 = scmp.eq.s32.totalorder %s34, 1
      %p460 = por %p458, %p459
      %p461 = scmp.ne.s32.totalorder %s452, %s453
      %p462 = scmp.eq.s32.totalorder %s34, 0
      %p463 = por %p461, %p462
      %p464 = scmp.ne.s32.totalorder %s452, %s453
      %p465 = scmp.eq.s32.totalorder %s35, 1
      %p466 = por %p464, %p465
      %p468 = scmp.ne.s32.totalorder %s453, %s467
      %p469 = scmp.eq.s32.totalorder %s35, 0
      %p470 = por %p468, %p469
      %s472 = sadd.s32 %s471, 1
      %p475 = scmp.eq.s32.totalorder %s29, 1
      %p476 = scmp.ne.s32.totalorder %s471, %s473
      %p477 = scmp.eq.s32.totalorder %s29, 0
      %p478 = por %p476, %p477
      %p479 = scmp.ne.s32.totalorder %s471, %s473
      %p480 = scmp.eq.s32.totalorder %s34, 1
      %p481 = por %p479, %p480
      %p482 = scmp.ne.s32.totalorder %s473, %s474
      %p483 = scmp.eq.s32.totalorder %s34, 0
      %p484 = por %p482, %p483
      %p485 = scmp.ne.s32.totalorder %s473, %s474
      %p486 = scmp.eq.s32.totalorder %s35, 1
      %p487 = por %p485, %p486
      %p489 = scmp.ne.s32.totalorder %s474, %s488
      %p490 = scmp.eq.s32.totalorder %s35, 0
      %p491 = por %p489, %p490
      %s492 = ssub.s32 %s36, %s48
      %p493 = scmp.eq.s32.totalorder %s492, 0
      %s495 = sadd.s32 %s494, 1
      %s496 = scalar_select %p493, %s494, %s495
      %p499 = pneg %p493
      %p500 = scmp.eq.s32.totalorder %s29, 1
      %p501 = por %p499, %p500
      %p502 = scmp.ne.s32.totalorder %s494, %s497
      %p503 = scmp.eq.s32.totalorder %s29, 0
      %p504 = por %p502, %p503
      %p505 = scmp.ne.s32.totalorder %s494, %s497
      %p506 = scmp.eq.s32.totalorder %s34, 1
      %p507 = por %p505, %p506
      %p508 = scmp.ne.s32.totalorder %s497, %s498
      %p509 = scmp.eq.s32.totalorder %s34, 0
      %p510 = por %p508, %p509
      %p511 = scmp.ne.s32.totalorder %s497, %s498
      %p512 = scmp.eq.s32.totalorder %s35, 1
      %p513 = por %p511, %p512
      %p515 = scmp.ne.s32.totalorder %s498, %s514
      %p516 = scmp.eq.s32.totalorder %s35, 0
      %p517 = por %p515, %p516
      %p518 = scmp.le.s32.totalorder 1, %s29
      %p519 = scmp.lt.s32.totalorder %s29, 3
      %p520 = pnand %p518, %p519
      %p521 = pneg %p520
      // Predicated region
      $region9: #{tpu_custom_call.1} parent=5 // pred_check
        _
      $region10: #{tpu_custom_call.1} parent=5 // pred_check_branch
        %523 = sbr.rel (%p520) target = $region12
      $region11: #{tpu_custom_call.1} parent=5 // pred_region
        %s524 = ssub.s32 %s29, 1
        // Predicated region
        $region13: #{tpu_custom_call.1} parent=11 // pred_check
          %p525 = pneg %p67
        $region14: #{tpu_custom_call.1} parent=11 // pred_check_branch
          %527 = sbr.rel (%p525) target = $region16
        $region15: #{tpu_custom_call.1} parent=11 // pred_region
          %s528 = smul.u32 2, %s38
          %s530 = ssub.s32 256, 256
          %531 = vsyncadd [#allocation6], %s530
          %s532 = smul.addr %s528, 128
          %s533 = scalar_lea.hbm %s0, %s532
          %s534 = sshll.u32 [#allocation5], 4
          %s535 = int_to_ptr.vmem [resolvable:$true] %s534
          %540 = dma.hbm_to_vmem [thread:$0]  %s533, 256, %s535, [#allocation6], 128, 128, 8
        $region16: #{tpu_custom_call.1} parent=11 // pred_fallthru
          _
        // Predicated region
        $region17: #{tpu_custom_call.1} parent=11 // pred_check
          %p541 = pneg %p88
        $region18: #{tpu_custom_call.1} parent=11 // pred_check_branch
          %543 = sbr.rel (%p541) target = $region20
        $region19: #{tpu_custom_call.1} parent=11 // pred_region
          %s545 = ssub.s32 128, 128
          %546 = vsyncadd [#allocation8], %s545
          %s548 = sshll.u32 [#allocation7], 4
          %s549 = int_to_ptr.vmem [resolvable:$true] %s548
          %551 = dma.hbm_to_vmem [thread:$0]  %s1, 128, %s549, [#allocation8]
        $region20: #{tpu_custom_call.1} parent=11 // pred_fallthru
          _
        // Predicated region
        $region21: #{tpu_custom_call.1} parent=11 // pred_check
          %p552 = pneg %p109
        $region22: #{tpu_custom_call.1} parent=11 // pred_check_branch
          %554 = sbr.rel (%p552) target = $region24
        $region23: #{tpu_custom_call.1} parent=11 // pred_region
          %s556 = ssub.s32 128, 128
          %557 = vsyncadd [#allocation8], %s556
          %s558 = sshll.u32 [#allocation9], 4
          %s559 = int_to_ptr.vmem [resolvable:$true] %s558
          %564 = dma.hbm_to_vmem [thread:$0]  %s2, 128, %s559, [#allocation8], 64, 64, 4
        $region24: #{tpu_custom_call.1} parent=11 // pred_fallthru
          _
        // Predicated region
        $region25: #{tpu_custom_call.1} parent=11 // pred_check
          %p565 = pneg %p130
        $region26: #{tpu_custom_call.1} parent=11 // pred_check_branch
          %567 = sbr.rel (%p565) target = $region28
        $region27: #{tpu_custom_call.1} parent=11 // pred_region
          %s569 = ssub.s32 16, 16
          %570 = vsyncadd [#allocation11], %s569
          %s572 = sshll.u32 [#allocation10], 4
          %s573 = int_to_ptr.vmem [resolvable:$true] %s572
          %575 = dma.hbm_to_vmem [thread:$0]  %s3, 16, %s573, [#allocation11]
        $region28: #{tpu_custom_call.1} parent=11 // pred_fallthru
          _
        // Predicated region
        $region29: #{tpu_custom_call.1} parent=11 // pred_check
          %p576 = pneg %p463
        $region30: #{tpu_custom_call.1} parent=11 // pred_check_branch
          %578 = sbr.rel (%p576) target = $region32
        $region31: #{tpu_custom_call.1} parent=11 // pred_region
          _
        $region32: #{tpu_custom_call.1} parent=11 // pred_fallthru
          _
        // Predicated region
        $region33: #{tpu_custom_call.1} parent=11 // pred_check
          %p579 = pneg %p484
        $region34: #{tpu_custom_call.1} parent=11 // pred_check_branch
          %581 = sbr.rel (%p579) target = $region36
        $region35: #{tpu_custom_call.1} parent=11 // pred_region
          _
        $region36: #{tpu_custom_call.1} parent=11 // pred_fallthru
          _
      $region12: #{tpu_custom_call.1} parent=5 // pred_fallthru
        _
      %p582 = scmp.lt.s32.totalorder %s29, 2
      // Predicated region
      $region37: #{tpu_custom_call.1} parent=5 // pred_check
        %p583 = pneg %p582
      $region38: #{tpu_custom_call.1} parent=5 // pred_check_branch
        %585 = sbr.rel (%p583) target = $region40
      $region39: #{tpu_custom_call.1} parent=5 // pred_region
        // Predicated region
        $region41: #{tpu_custom_call.1} parent=39 // pred_check
          %p586 = pneg %p150
        $region42: #{tpu_custom_call.1} parent=39 // pred_check_branch
          %588 = sbr.rel (%p586) target = $region44
        $region43: #{tpu_custom_call.1} parent=39 // pred_region
          %p589 = scmp.lt.s32.totalorder %s37, 1
          %s590 = scalar_select %p589, %s37, 1
          %s591 = smul.addr %s590, 4
          %s592 = smul.addr %s591, 4
          %s593 = scalar_lea.vmem %s4, %s592
        $region44: #{tpu_custom_call.1} parent=39 // pred_fallthru
          _
        // Predicated region
        $region45: #{tpu_custom_call.1} parent=39 // pred_check
          %p594 = pneg %p176
        $region46: #{tpu_custom_call.1} parent=39 // pred_check_branch
          %596 = sbr.rel (%p594) target = $region48
        $region47: #{tpu_custom_call.1} parent=39 // pred_region
          %p597 = scmp.lt.s32.totalorder %s37, 1
          %s598 = scalar_select %p597, %s37, 1
          %s599 = scalar_lea.vmem %s5, %s598
        $region48: #{tpu_custom_call.1} parent=39 // pred_fallthru
          _
        // Predicated region
        $region49: #{tpu_custom_call.1} parent=39 // pred_check
          %p600 = pneg %p202
        $region50: #{tpu_custom_call.1} parent=39 // pred_check_branch
          %602 = sbr.rel (%p600) target = $region52
        $region51: #{tpu_custom_call.1} parent=39 // pred_region
          %p603 = scmp.lt.s32.totalorder %s37, 1
          %s604 = scalar_select %p603, %s37, 1
          %s605 = smul.addr %s604, 4
          %s606 = smul.addr %s605, 4
          %s607 = scalar_lea.vmem %s6, %s606
        $region52: #{tpu_custom_call.1} parent=39 // pred_fallthru
          _
        // Predicated region
        $region53: #{tpu_custom_call.1} parent=39 // pred_check
          %p608 = pneg %p228
        $region54: #{tpu_custom_call.1} parent=39 // pred_check_branch
          %610 = sbr.rel (%p608) target = $region56
        $region55: #{tpu_custom_call.1} parent=39 // pred_region
          %p611 = scmp.lt.s32.totalorder %s37, 1
          %s612 = scalar_select %p611, %s37, 1
          %s613 = scalar_lea.vmem %s7, %s612
        $region56: #{tpu_custom_call.1} parent=39 // pred_fallthru
          _
        // Predicated region
        $region57: #{tpu_custom_call.1} parent=39 // pred_check
          %p614 = pneg %p254
        $region58: #{tpu_custom_call.1} parent=39 // pred_check_branch
          %616 = sbr.rel (%p614) target = $region60
        $region59: #{tpu_custom_call.1} parent=39 // pred_region
          %p617 = scmp.lt.s32.totalorder %s37, 1
          %s618 = scalar_select %p617, %s37, 1
          %s619 = smul.addr %s618, 4
          %s620 = smul.addr %s619, 4
          %s621 = scalar_lea.vmem %s8, %s620
        $region60: #{tpu_custom_call.1} parent=39 // pred_fallthru
          _
        // Predicated region
        $region61: #{tpu_custom_call.1} parent=39 // pred_check
          %p622 = pneg %p280
        $region62: #{tpu_custom_call.1} parent=39 // pred_check_branch
          %624 = sbr.rel (%p622) target = $region64
        $region63: #{tpu_custom_call.1} parent=39 // pred_region
          %p625 = scmp.lt.s32.totalorder %s37, 1
          %s626 = scalar_select %p625, %s37, 1
          %s627 = scalar_lea.vmem %s9, %s626
        $region64: #{tpu_custom_call.1} parent=39 // pred_fallthru
          _
        // Predicated region
        $region65: #{tpu_custom_call.1} parent=39 // pred_check
          %p628 = pneg %p306
        $region66: #{tpu_custom_call.1} parent=39 // pred_check_branch
          %630 = sbr.rel (%p628) target = $region68
        $region67: #{tpu_custom_call.1} parent=39 // pred_region
          %p631 = scmp.lt.s32.totalorder %s37, 1
          %s632 = scalar_select %p631, %s37, 1
          %s633 = smul.addr %s632, 8
          %s634 = smul.addr %s633, 4
          %s635 = scalar_lea.vmem %s10, %s634
        $region68: #{tpu_custom_call.1} parent=39 // pred_fallthru
          _
        // Predicated region
        $region69: #{tpu_custom_call.1} parent=39 // pred_check
          %p636 = pneg %p332
        $region70: #{tpu_custom_call.1} parent=39 // pred_check_branch
          %638 = sbr.rel (%p636) target = $region72
        $region71: #{tpu_custom_call.1} parent=39 // pred_region
          %p639 = scmp.lt.s32.totalorder %s37, 1
          %s640 = scalar_select %p639, %s37, 1
          %s641 = scalar_lea.vmem %s11, %s640
        $region72: #{tpu_custom_call.1} parent=39 // pred_fallthru
          _
        // Predicated region
        $region73: #{tpu_custom_call.1} parent=39 // pred_check
          %p642 = pneg %p358
        $region74: #{tpu_custom_call.1} parent=39 // pred_check_branch
          %644 = sbr.rel (%p642) target = $region76
        $region75: #{tpu_custom_call.1} parent=39 // pred_region
          %p645 = scmp.lt.s32.totalorder %s37, 1
          %s646 = scalar_select %p645, %s37, 1
          %s647 = scalar_lea.vmem %s12, %s646
        $region76: #{tpu_custom_call.1} parent=39 // pred_fallthru
          _
        // Predicated region
        $region77: #{tpu_custom_call.1} parent=39 // pred_check
          %p648 = pneg %p384
        $region78: #{tpu_custom_call.1} parent=39 // pred_check_branch
          %650 = sbr.rel (%p648) target = $region80
        $region79: #{tpu_custom_call.1} parent=39 // pred_region
          %p651 = scmp.lt.s32.totalorder %s37, 1
          %s652 = scalar_select %p651, %s37, 1
          %s653 = scalar_lea.vmem %s13, %s652
        $region80: #{tpu_custom_call.1} parent=39 // pred_fallthru
          _
        // Predicated region
        $region81: #{tpu_custom_call.1} parent=39 // pred_check
          %p654 = pneg %p410
        $region82: #{tpu_custom_call.1} parent=39 // pred_check_branch
          %656 = sbr.rel (%p654) target = $region84
        $region83: #{tpu_custom_call.1} parent=39 // pred_region
          %p657 = scmp.lt.s32.totalorder %s37, 1
          %s658 = scalar_select %p657, %s37, 1
          %s659 = scalar_lea.vmem %s14, %s658
        $region84: #{tpu_custom_call.1} parent=39 // pred_fallthru
          _
        // Predicated region
        $region85: #{tpu_custom_call.1} parent=39 // pred_check
          %p660 = pneg %p436
        $region86: #{tpu_custom_call.1} parent=39 // pred_check_branch
          %662 = sbr.rel (%p660) target = $region88
        $region87: #{tpu_custom_call.1} parent=39 // pred_region
          %p663 = scmp.lt.s32.totalorder %s37, 1
          %s664 = scalar_select %p663, %s37, 1
          %s665 = scalar_lea.vmem %s15, %s664
        $region88: #{tpu_custom_call.1} parent=39 // pred_fallthru
          _
      $region40: #{tpu_custom_call.1} parent=5 // pred_fallthru
        _
      %p666 = scmp.le.s32.totalorder 1, %s29
      %p667 = scmp.lt.s32.totalorder %s29, 3
      %p668 = pnand %p666, %p667
      %p669 = pneg %p668
      // Predicated region
      $region89: #{tpu_custom_call.1} parent=5 // pred_check
        _
      $region90: #{tpu_custom_call.1} parent=5 // pred_check_branch
        %671 = sbr.rel (%p668) target = $region92
      $region91: #{tpu_custom_call.1} parent=5 // pred_region
        %s672 = ssub.s32 %s29, 1
        // Predicated region
        $region93: #{tpu_custom_call.1} parent=91 // pred_check
          %p673 = pneg %p67
        $region94: #{tpu_custom_call.1} parent=91 // pred_check_branch
          %675 = sbr.rel (%p673) target = $region96
        $region95: #{tpu_custom_call.1} parent=91 // pred_region
          %676 = dma.done [#allocation6], 256
        $region96: #{tpu_custom_call.1} parent=91 // pred_fallthru
          _
        // Predicated region
        $region97: #{tpu_custom_call.1} parent=91 // pred_check
          %p677 = pneg %p88
        $region98: #{tpu_custom_call.1} parent=91 // pred_check_branch
          %679 = sbr.rel (%p677) target = $region100
        $region99: #{tpu_custom_call.1} parent=91 // pred_region
          %680 = dma.done [#allocation8], 128
        $region100: #{tpu_custom_call.1} parent=91 // pred_fallthru
          _
        // Predicated region
        $region101: #{tpu_custom_call.1} parent=91 // pred_check
          %p681 = pneg %p109
        $region102: #{tpu_custom_call.1} parent=91 // pred_check_branch
          %683 = sbr.rel (%p681) target = $region104
        $region103: #{tpu_custom_call.1} parent=91 // pred_region
          %684 = dma.done [#allocation8], 128
        $region104: #{tpu_custom_call.1} parent=91 // pred_fallthru
          _
        // Predicated region
        $region105: #{tpu_custom_call.1} parent=91 // pred_check
          %p685 = pneg %p130
        $region106: #{tpu_custom_call.1} parent=91 // pred_check_branch
          %687 = sbr.rel (%p685) target = $region108
        $region107: #{tpu_custom_call.1} parent=91 // pred_region
          %688 = dma.done [#allocation11], 16
        $region108: #{tpu_custom_call.1} parent=91 // pred_fallthru
          _
        %p689 = pneg %p67
        %p690 = pneg %p64
        %p691 = pneg %p88
        %p692 = pneg %p85
        %p693 = pneg %p109
        %p694 = pneg %p106
        %p695 = pneg %p130
        %p696 = pneg %p127
        %p697 = scmp.lt.s32.totalorder %s39, 1
        %s698 = scalar_select %p697, %s39, 1
        %s699 = smul.addr %s698, 4
        %s700 = smul.addr %s699, 4
        %s701 = scalar_lea.vmem %s4, %s700
        %p702 = pneg %p156
        %p703 = pneg %p153
        %p704 = scmp.lt.s32.totalorder %s39, 1
        %s705 = scalar_select %p704, %s39, 1
        %s706 = scalar_lea.vmem %s5, %s705
        %p707 = pneg %p182
        %p708 = pneg %p179
        %p709 = scmp.lt.s32.totalorder %s39, 1
        %s710 = scalar_select %p709, %s39, 1
        %s711 = smul.addr %s710, 4
        %s712 = smul.addr %s711, 4
        %s713 = scalar_lea.vmem %s6, %s712
        %p714 = pneg %p208
        %p715 = pneg %p205
        %p716 = scmp.lt.s32.totalorder %s39, 1
        %s717 = scalar_select %p716, %s39, 1
        %s718 = scalar_lea.vmem %s7, %s717
        %p719 = pneg %p234
        %p720 = pneg %p231
        %p721 = scmp.lt.s32.totalorder %s39, 1
        %s722 = scalar_select %p721, %s39, 1
        %s723 = smul.addr %s722, 4
        %s724 = smul.addr %s723, 4
        %s725 = scalar_lea.vmem %s8, %s724
        %p726 = pneg %p260
        %p727 = pneg %p257
        %p728 = scmp.lt.s32.totalorder %s39, 1
        %s729 = scalar_select %p728, %s39, 1
        %s730 = scalar_lea.vmem %s9, %s729
        %p731 = pneg %p286
        %p732 = pneg %p283
        %p733 = scmp.lt.s32.totalorder %s39, 1
        %s734 = scalar_select %p733, %s39, 1
        %s735 = smul.addr %s734, 8
        %s736 = smul.addr %s735, 4
        %s737 = scalar_lea.vmem %s10, %s736
        %p738 = pneg %p312
        %p739 = pneg %p309
        %p740 = scmp.lt.s32.totalorder %s39, 1
        %s741 = scalar_select %p740, %s39, 1
        %s742 = scalar_lea.vmem %s11, %s741
        %p743 = pneg %p338
        %p744 = pneg %p335
        %p745 = scmp.lt.s32.totalorder %s39, 1
        %s746 = scalar_select %p745, %s39, 1
        %s747 = scalar_lea.vmem %s12, %s746
        %p748 = pneg %p364
        %p749 = pneg %p361
        %p750 = scmp.lt.s32.totalorder %s39, 1
        %s751 = scalar_select %p750, %s39, 1
        %s752 = scalar_lea.vmem %s13, %s751
        %p753 = pneg %p390
        %p754 = pneg %p387
        %p755 = scmp.lt.s32.totalorder %s39, 1
        %s756 = scalar_select %p755, %s39, 1
        %s757 = scalar_lea.vmem %s14, %s756
        %p758 = pneg %p416
        %p759 = pneg %p413
        %p760 = scmp.lt.s32.totalorder %s39, 1
        %s761 = scalar_select %p760, %s39, 1
        %s762 = scalar_lea.vmem %s15, %s761
        %p763 = pneg %p442
        %p764 = pneg %p439
        %p765 = pneg %p463
        %p766 = pneg %p460
        %p767 = pneg %p484
        %p768 = pneg %p481
        %p769 = pneg %p510
        %p770 = pneg %p507
        %p771 = scmp.lt.s32.totalorder %s38, 0
        %s772 = scalar_select %p771, %s38, 0
        %s773 = smul.addr %s772, 2
        %s774 = scalar_lea.vmem %s18, %s773
        %s775 = smul.u32 2, %s38
        %p776 = scmp.lt.s32.totalorder %s39, 1
        %s777 = scalar_select %p776, %s39, 1
        %s778 = smul.addr %s777, 4
        %s779 = smul.addr %s778, 4
        %s780 = scalar_lea.vmem %s4, %s779
        %p781 = scmp.lt.s32.totalorder %s39, 1
        %s782 = scalar_select %p781, %s39, 1
        %s783 = scalar_lea.vmem %s5, %s782
        %p784 = scmp.lt.s32.totalorder %s39, 1
        %s785 = scalar_select %p784, %s39, 1
        %s786 = smul.addr %s785, 4
        %s787 = smul.addr %s786, 4
        %s788 = scalar_lea.vmem %s6, %s787
        %p789 = scmp.lt.s32.totalorder %s39, 1
        %s790 = scalar_select %p789, %s39, 1
        %s791 = scalar_lea.vmem %s7, %s790
        %p792 = scmp.lt.s32.totalorder %s39, 1
        %s793 = scalar_select %p792, %s39, 1
        %s794 = smul.addr %s793, 4
        %s795 = smul.addr %s794, 4
        %s796 = scalar_lea.vmem %s8, %s795
        %p797 = scmp.lt.s32.totalorder %s39, 1
        %s798 = scalar_select %p797, %s39, 1
        %s799 = scalar_lea.vmem %s9, %s798
        %p800 = scmp.lt.s32.totalorder %s39, 1
        %s801 = scalar_select %p800, %s39, 1
        %s802 = smul.addr %s801, 8
        %s803 = smul.addr %s802, 4
        %s804 = scalar_lea.vmem %s10, %s803
        %p805 = scmp.lt.s32.totalorder %s39, 1
        %s806 = scalar_select %p805, %s39, 1
        %s807 = scalar_lea.vmem %s11, %s806
        %p808 = scmp.lt.s32.totalorder %s39, 1
        %s809 = scalar_select %p808, %s39, 1
        %s810 = scalar_lea.vmem %s12, %s809
        %p811 = scmp.lt.s32.totalorder %s39, 1
        %s812 = scalar_select %p811, %s39, 1
        %s813 = scalar_lea.vmem %s13, %s812
        %p814 = scmp.lt.s32.totalorder %s39, 1
        %s815 = scalar_select %p814, %s39, 1
        %s816 = scalar_lea.vmem %s14, %s815
        %p817 = scmp.lt.s32.totalorder %s39, 1
        %s818 = scalar_select %p817, %s39, 1
        %s819 = scalar_lea.vmem %s15, %s818
        %p820 = scmp.lt.s32.totalorder %s38, 0
        %s821 = scalar_select %p820, %s38, 0
        %s822 = smul.addr %s821, 2
        %s823 = scalar_lea.vmem %s18, %s822
        %p825 = scmp.eq.s32.totalorder %s39, 0
        // Predicated region
        $region109: #{tpu_custom_call.1} parent=91 // pred_check
          %p826 = pneg %p825
        $region110: #{tpu_custom_call.1} parent=91 // pred_check_branch
          %828 = sbr.rel (%p826) target = $region112
        $region111: #{tpu_custom_call.1} parent=91 // pred_region
          %v829 = vld [vmem:[#allocation5] sm:$0xff]
          %v830 = vld [vmem:[#allocation5 + $0x8] sm:$0xff]
          %v831 = vpack.c.bf16 %v830, %v829
          %v832 = vld [vmem:[#allocation9] sm:$0xf]
          %v833 = vld [vmem:[#allocation9 + $0x4] sm:$0xf]
          %v834 = vld [vmem:[#allocation10] sm:$0x1]
          %v836 = vlaneseq
          %v837 = vshrl.u32 %v836, 7
          %v838 = vsub.s32 0, %v837
          %v839 = vrot.slane %v834, %v838
          %v843 = vunpack.c.l.b16 %v832
          %v844 = vunpack.c.l.b16 %v833
          %v845 = vpack.c.b16 %v844, %v843
          %vm847 = vcmask 130048
          %v849 = vsel %vm847, %v831, 0
          %851 = vmatprep.subr.bf16.mxu0 0
          %852 = vmatpush1.bf16.msra.mxu0 0
          %853 = vmatprep.subr.bf16.mxu0 0
          %854 = vmatpush1.bf16.msra.mxu0 0
          %855 = vmatprep.subr.bf16.mxu0 0
          %856 = vmatpush1.bf16.msra.mxu0 0
          %857 = vmatprep.subr.bf16.mxu0 0
          %858 = vmatpush1.bf16.msra.mxu0 0
          %859 = vmatprep.subr.bf16.mxu0 0
          %860 = vmatpush1.bf16.msra.mxu0 0
          %861 = vmatprep.subr.bf16.mxu0 0
          %862 = vmatpush1.bf16.msra.mxu0 0
          %863 = vmatprep.subr.bf16.mxu0 0
          %864 = vmatpush1.bf16.msra.mxu0 0
          %865 = vmatprep.subr.bf16.mxu0 0
          %866 = vmatpush1.bf16.msra.mxu0 %v845
          %867 = vmatprep.subr.bf16.mxu0 0
          %868 = vmatpush2.bf16.msra.mxu0 0
          %869 = vmatprep.subr.bf16.mxu0 0
          %870 = vmatpush2.bf16.msra.mxu0 0
          %871 = vmatprep.subr.bf16.mxu0 0
          %872 = vmatpush2.bf16.msra.mxu0 0
          %873 = vmatprep.subr.bf16.mxu0 0
          %874 = vmatpush2.bf16.msra.mxu0 0
          %875 = vmatprep.subr.bf16.mxu0 0
          %876 = vmatpush2.bf16.msra.mxu0 0
          %877 = vmatprep.subr.bf16.mxu0 0
          %878 = vmatpush2.bf16.msra.mxu0 0
          %879 = vmatprep.subr.bf16.mxu0 0
          %880 = vmatpush2.bf16.msra.mxu0 0
          %881 = vmatprep.subr.bf16.mxu0 0
          %882 = vmatpush2.bf16.msra.mxu0 0
          %883 = vmatprep.mubr.bf16.mxu0 0
          %884 = vmatmul.mubr.bf16.gmra.mxu0 %v849
          %v885 = vpop.f32.mrf.mxu0
          %v886 = vadd.f32 %v839, %v885
          %v887 = vpop.f32.mrf.mxu0
          %v888 = vpop.f32.mrf.mxu0
          %v889 = vadd.f32 %v839, %v888
          %v890 = vpop.f32.mrf.mxu0
          %891 = vdwg.mxu0
          %v892 = vmul.f32 %v886, 5.656854
          %v893 = vmul.f32 %v889, 5.656854
          %v894 = vld [vmem:[#allocation7] sm:$0xff]
          %v895 = vadd.f32 %v892, %v894
          %v896 = vadd.f32 %v893, %v894
          %vm897 = vcmask 261120
          %v898 = vsel %vm897, %v895, 0.0
          %899 = vadd.xlane.f32.xlu0 %v898
          %v900 = vpop.xlane.xlu0 %899
          %v901 = vsel %vm897, %v896, 0.0
          %902 = vadd.xlane.f32.xlu0 %v901
          %v903 = vpop.xlane.xlu0 %902
          %vm904 = vcmp.ne.f32.partialorder %v900, 0.0
          %vm905 = vcmp.ne.f32.partialorder %v903, 0.0
          %v906 = vsel %vm904, 1, 0
          %v907 = vsel %vm905, 1, 0
          %v908 = vcvt.s32.f32 %v906
          %v909 = vcvt.s32.f32 %v907
          %v912 = vlaneseq
          %v913 = vand.u32 %v912, 127
          %v914 = vlaneseq
          %v915 = vshrl.u32 %v914, 7
          %v916 = vsub.s32 %v913, %v915
          %v917 = vrot.slane %v908, %v916
          %v918 = vlaneseq
          %v919 = vshrl.u32 %v918, 7
          %v920 = vsub.s32 %v913, %v919
          %v921 = vrot.slane %v909, %v920
          %vm924 = vcmask 57344
          %925 = vst.msk [vmem:[#allocation3] sm:$0x1] %vm924, %v917
          %926 = vst.msk [vmem:[#allocation3 + $0x1] sm:$0x1] %vm924, %v921
          %927 = vst.msk [vmem:[#allocation2] sm:$0xff] %vm897, %v895
          %928 = vst.msk [vmem:[#allocation2 + $0x8] sm:$0xff] %vm897, %v896
        $region112: #{tpu_custom_call.1} parent=91 // pred_fallthru
          _
        %v929 = vld [vmem:[#allocation2] sm:$0xff]
        %v930 = vld [vmem:[#allocation2 + $0x8] sm:$0xff]
        %v931 = vpack.c.bf16 %v930, %v929
        %v932 = vld [vmem:[%s780] sm:$0xf]
        %v933 = vld [vmem:[%s780 + $0x4] sm:$0xf]
        %v934 = vld [vmem:[%s780 + $0x8] sm:$0xf]
        %v935 = vld [vmem:[%s780 + $0xc] sm:$0xf]
        %v936 = vld [vmem:[%s783] sm:$0x1]
        %v938 = vlaneseq
        %v939 = vshrl.u32 %v938, 7
        %v940 = vsub.s32 0, %v939
        %v941 = vrot.slane %v936, %v940
        %v947 = vunpack.c.l.b16 %v932
        %v948 = vunpack.c.l.b16 %v933
        %v949 = vunpack.c.l.b16 %v934
        %v950 = vunpack.c.l.b16 %v935
        %v951 = vpack.c.b16 %v948, %v947
        %v952 = vpack.c.b16 %v950, %v949
        %vm955 = vcmask 261120
        %v957 = vsel %vm955, %v931, 0
        %959 = vmatprep.subr.bf16.mxu0 0
        %960 = vmatpush1.bf16.msra.mxu0 0
        %961 = vmatprep.subr.bf16.mxu0 0
        %962 = vmatpush1.bf16.msra.mxu0 0
        %963 = vmatprep.subr.bf16.mxu0 0
        %964 = vmatpush1.bf16.msra.mxu0 0
        %965 = vmatprep.subr.bf16.mxu0 0
        %966 = vmatpush1.bf16.msra.mxu0 0
        %967 = vmatprep.subr.bf16.mxu0 0
        %968 = vmatpush1.bf16.msra.mxu0 0
        %969 = vmatprep.subr.bf16.mxu0 0
        %970 = vmatpush1.bf16.msra.mxu0 0
        %971 = vmatprep.subr.bf16.mxu0 0
        %972 = vmatpush1.bf16.msra.mxu0 %v952
        %973 = vmatprep.subr.bf16.mxu0 0
        %974 = vmatpush1.bf16.msra.mxu0 %v951
        %975 = vmatprep.subr.bf16.mxu0 0
        %976 = vmatpush2.bf16.msra.mxu0 0
        %977 = vmatprep.subr.bf16.mxu0 0
        %978 = vmatpush2.bf16.msra.mxu0 0
        %979 = vmatprep.subr.bf16.mxu0 0
        %980 = vmatpush2.bf16.msra.mxu0 0
        %981 = vmatprep.subr.bf16.mxu0 0
        %982 = vmatpush2.bf16.msra.mxu0 0
        %983 = vmatprep.subr.bf16.mxu0 0
        %984 = vmatpush2.bf16.msra.mxu0 0
        %985 = vmatprep.subr.bf16.mxu0 0
        %986 = vmatpush2.bf16.msra.mxu0 0
        %987 = vmatprep.subr.bf16.mxu0 0
        %988 = vmatpush2.bf16.msra.mxu0 0
        %989 = vmatprep.subr.bf16.mxu0 0
        %990 = vmatpush2.bf16.msra.mxu0 0
        %991 = vmatprep.mubr.bf16.mxu0 0
        %992 = vmatmul.mubr.bf16.gmra.mxu0 %v957
        %v993 = vpop.f32.mrf.mxu0
        %v994 = vadd.f32 %v941, %v993
        %v995 = vpop.f32.mrf.mxu0
        %v996 = vpop.f32.mrf.mxu0
        %v997 = vadd.f32 %v941, %v996
        %v998 = vpop.f32.mrf.mxu0
        %999 = vdwg.mxu0
        %v1000 = vld [vmem:[#allocation3] sm:$0x1]
        %v1001 = vld [vmem:[#allocation3 + $0x1] sm:$0x1]
        %v1004 = vlaneseq
        %v1005 = vshrl.u32 %v1004, 7
        %v1006 = vsub.s32 0, %v1005
        %v1007 = vrot.slane %v1000, %v1006
        %v1008 = vlaneseq
        %v1009 = vshrl.u32 %v1008, 7
        %v1010 = vsub.s32 0, %v1009
        %v1011 = vrot.slane %v1001, %v1010
        %v1014 = vpack.c.bf16 %v994, %v994
        %v1015 = vpack.c.bf16 %v997, %v997
        %1017 = vrot.lane.b32.xlu0 %v1014, 96
        %v1018 = vpop.permute.xlu0 %1017
        %vm1019 = vcmask 64512
        %v1021 = vsel %vm1019, %v1014, 0
        %v1024 = vsel %vm1019, %v1018, 0
        %1026 = vmatprep.subr.bf16.mxu0 0
        %1027 = vmatpush1.bf16.xpose.msra.mxu0 0
        %1028 = vmatprep.subr.bf16.mxu0 0
        %1029 = vmatpush1.bf16.xpose.msra.mxu0 0
        %1030 = vmatprep.subr.bf16.mxu0 0
        %1031 = vmatpush1.bf16.xpose.msra.mxu0 0
        %1032 = vmatprep.subr.bf16.mxu0 0
        %1033 = vmatpush1.bf16.xpose.msra.mxu0 0
        %1034 = vmatprep.subr.bf16.mxu0 0
        %1035 = vmatpush1.bf16.xpose.msra.mxu0 0
        %1036 = vmatprep.subr.bf16.mxu0 0
        %1037 = vmatpush1.bf16.xpose.msra.mxu0 0
        %1038 = vmatprep.subr.bf16.mxu0 0
        %1039 = vmatpush1.bf16.xpose.msra.mxu0 0
        %1040 = vmatprep.subr.bf16.mxu0 0
        %1041 = vmatpush1.bf16.xpose.msra.mxu0 %v1024
        %1042 = vmatprep.subr.bf16.mxu0 0
        %1043 = vmatpush2.bf16.xpose.msra.mxu0 0
        %1044 = vmatprep.subr.bf16.mxu0 0
        %1045 = vmatpush2.bf16.xpose.msra.mxu0 0
        %1046 = vmatprep.subr.bf16.mxu0 0
        %1047 = vmatpush2.bf16.xpose.msra.mxu0 0
        %1048 = vmatprep.subr.bf16.mxu0 0
        %1049 = vmatpush2.bf16.xpose.msra.mxu0 0
        %1050 = vmatprep.subr.bf16.mxu0 0
        %1051 = vmatpush2.bf16.xpose.msra.mxu0 0
        %1052 = vmatprep.subr.bf16.mxu0 0
        %1053 = vmatpush2.bf16.xpose.msra.mxu0 0
        %1054 = vmatprep.subr.bf16.mxu0 0
        %1055 = vmatpush2.bf16.xpose.msra.mxu0 0
        %1056 = vmatprep.subr.bf16.mxu0 0
        %1057 = vmatpush2.bf16.xpose.msra.mxu0 0
        %1058 = vmatprep.mubr.bf16.mxu0 0
        %1059 = vmatmul.mubr.bf16.gmra.mxu0 %v1021
        %v1060 = vpop.f32.mrf.mxu0
        %v1061 = vadd.f32 %v1007, %v1060
        %v1062 = vpop.f32.mrf.mxu0
        %v1063 = vpop.f32.mrf.mxu0
        %v1064 = vpop.f32.mrf.mxu0
        %1065 = vdwg.mxu0
        %1067 = vrot.lane.b32.xlu0 %v1015, 96
        %v1068 = vpop.permute.xlu0 %1067
        %v1070 = vsel %vm1019, %v1015, 0
        %v1073 = vsel %vm1019, %v1068, 0
        %1075 = vmatprep.subr.bf16.mxu0 0
        %1076 = vmatpush1.bf16.xpose.msra.mxu0 0
        %1077 = vmatprep.subr.bf16.mxu0 0
        %1078 = vmatpush1.bf16.xpose.msra.mxu0 0
        %1079 = vmatprep.subr.bf16.mxu0 0
        %1080 = vmatpush1.bf16.xpose.msra.mxu0 0
        %1081 = vmatprep.subr.bf16.mxu0 0
        %1082 = vmatpush1.bf16.xpose.msra.mxu0 0
        %1083 = vmatprep.subr.bf16.mxu0 0
        %1084 = vmatpush1.bf16.xpose.msra.mxu0 0
        %1085 = vmatprep.subr.bf16.mxu0 0
        %1086 = vmatpush1.bf16.xpose.msra.mxu0 0
        %1087 = vmatprep.subr.bf16.mxu0 0
        %1088 = vmatpush1.bf16.xpose.msra.mxu0 0
        %1089 = vmatprep.subr.bf16.mxu0 0
        %1090 = vmatpush1.bf16.xpose.msra.mxu0 %v1073
        %1091 = vmatprep.subr.bf16.mxu0 0
        %1092 = vmatpush2.bf16.xpose.msra.mxu0 0
        %1093 = vmatprep.subr.bf16.mxu0 0
        %1094 = vmatpush2.bf16.xpose.msra.mxu0 0
        %1095 = vmatprep.subr.bf16.mxu0 0
        %1096 = vmatpush2.bf16.xpose.msra.mxu0 0
        %1097 = vmatprep.subr.bf16.mxu0 0
        %1098 = vmatpush2.bf16.xpose.msra.mxu0 0
        %1099 = vmatprep.subr.bf16.mxu0 0
        %1100 = vmatpush2.bf16.xpose.msra.mxu0 0
        %1101 = vmatprep.subr.bf16.mxu0 0
        %1102 = vmatpush2.bf16.xpose.msra.mxu0 0
        %1103 = vmatprep.subr.bf16.mxu0 0
        %1104 = vmatpush2.bf16.xpose.msra.mxu0 0
        %1105 = vmatprep.subr.bf16.mxu0 0
        %1106 = vmatpush2.bf16.xpose.msra.mxu0 0
        %1107 = vmatprep.mubr.bf16.mxu0 0
        %1108 = vmatmul.mubr.bf16.gmra.mxu0 %v1070
        %v1109 = vpop.f32.mrf.mxu0
        %v1110 = vadd.f32 %v1011, %v1109
        %v1111 = vpop.f32.mrf.mxu0
        %v1112 = vpop.f32.mrf.mxu0
        %v1113 = vpop.f32.mrf.mxu0
        %1114 = vdwg.mxu0
        %v1115 = vsel %vm1019, %v1061, -inf
        %1116 = vmax.xlane.f32.xlu0 %v1115
        %v1117 = vpop.xlane.xlu0 %1116
        %v1118 = vsel %vm1019, %v1110, -inf
        %1119 = vmax.xlane.f32.xlu0 %v1118
        %v1120 = vpop.xlane.xlu0 %1119
        %v1121 = vsub.f32 %v1061, %v1117
        %v1122 = vsub.f32 %v1110, %v1120
        %v1123 = vmul.f32 %v1121, 1.442695
        %v1124 = vpow.pop %v1123
        %v1125 = vmul.f32 %v1122, 1.442695
        %v1126 = vpow.pop %v1125
        %v1127 = vsel %vm1019, %v1124, 0.0
        %1128 = vadd.xlane.f32.xlu0 %v1127
        %v1129 = vpop.xlane.xlu0 %1128
        %v1130 = vsel %vm1019, %v1126, 0.0
        %1131 = vadd.xlane.f32.xlu0 %v1130
        %v1132 = vpop.xlane.xlu0 %1131
        %v1133 = vpack.c.bf16 %v1124, %v1124
        %v1134 = vpack.c.bf16 %v1126, %v1126
        %1135 = vrot.lane.b32.xlu0 %v1014, 64
        %v1136 = vpop.permute.xlu0 %1135
        %v1138 = vsel %vm1019, %v1133, 0
        %vm1140 = vcmask 1043456
        %v1142 = vsel %vm1140, %v1136, 0
        %1144 = vmatprep.subr.bf16.mxu0 0
        %1145 = vmatpush1.bf16.msra.mxu0 0
        %1146 = vmatprep.subr.bf16.mxu0 0
        %1147 = vmatpush1.bf16.msra.mxu0 0
        %1148 = vmatprep.subr.bf16.mxu0 0
        %1149 = vmatpush1.bf16.msra.mxu0 0
        %1150 = vmatprep.subr.bf16.mxu0 0
        %1151 = vmatpush1.bf16.msra.mxu0 0
        %1152 = vmatprep.subr.bf16.mxu0 0
        %1153 = vmatpush1.bf16.msra.mxu0 0
        %1154 = vmatprep.subr.bf16.mxu0 0
        %1155 = vmatpush1.bf16.msra.mxu0 0
        %1156 = vmatprep.subr.bf16.mxu0 0
        %1157 = vmatpush1.bf16.msra.mxu0 0
        %1158 = vmatprep.subr.bf16.mxu0 0
        %1159 = vmatpush1.bf16.msra.mxu0 %v1142
        %1160 = vmatprep.subr.bf16.mxu0 0
        %1161 = vmatpush2.bf16.msra.mxu0 0
        %1162 = vmatprep.subr.bf16.mxu0 0
        %1163 = vmatpush2.bf16.msra.mxu0 0
        %1164 = vmatprep.subr.bf16.mxu0 0
        %1165 = vmatpush2.bf16.msra.mxu0 0
        %1166 = vmatprep.subr.bf16.mxu0 0
        %1167 = vmatpush2.bf16.msra.mxu0 0
        %1168 = vmatprep.subr.bf16.mxu0 0
        %1169 = vmatpush2.bf16.msra.mxu0 0
        %1170 = vmatprep.subr.bf16.mxu0 0
        %1171 = vmatpush2.bf16.msra.mxu0 0
        %1172 = vmatprep.subr.bf16.mxu0 0
        %1173 = vmatpush2.bf16.msra.mxu0 0
        %1174 = vmatprep.subr.bf16.mxu0 0
        %1175 = vmatpush2.bf16.msra.mxu0 0
        %1176 = vmatprep.mubr.bf16.mxu0 0
        %1177 = vmatmul.mubr.bf16.gmra.mxu0 %v1138
        %v1178 = vpop.f32.mrf.mxu0
        %v1179 = vadd.f32 0.0, %v1178
        %v1180 = vpop.f32.mrf.mxu0
        %v1181 = vpop.f32.mrf.mxu0
        %v1182 = vpop.f32.mrf.mxu0
        %1183 = vdwg.mxu0
        %1184 = vrot.lane.b32.xlu0 %v1015, 64
        %v1185 = vpop.permute.xlu0 %1184
        %v1187 = vsel %vm1019, %v1134, 0
        %v1190 = vsel %vm1140, %v1185, 0
        %1192 = vmatprep.subr.bf16.mxu0 0
        %1193 = vmatpush1.bf16.msra.mxu0 0
        %1194 = vmatprep.subr.bf16.mxu0 0
        %1195 = vmatpush1.bf16.msra.mxu0 0
        %1196 = vmatprep.subr.bf16.mxu0 0
        %1197 = vmatpush1.bf16.msra.mxu0 0
        %1198 = vmatprep.subr.bf16.mxu0 0
        %1199 = vmatpush1.bf16.msra.mxu0 0
        %1200 = vmatprep.subr.bf16.mxu0 0
        %1201 = vmatpush1.bf16.msra.mxu0 0
        %1202 = vmatprep.subr.bf16.mxu0 0
        %1203 = vmatpush1.bf16.msra.mxu0 0
        %1204 = vmatprep.subr.bf16.mxu0 0
        %1205 = vmatpush1.bf16.msra.mxu0 0
        %1206 = vmatprep.subr.bf16.mxu0 0
        %1207 = vmatpush1.bf16.msra.mxu0 %v1190
        %1208 = vmatprep.subr.bf16.mxu0 0
        %1209 = vmatpush2.bf16.msra.mxu0 0
        %1210 = vmatprep.subr.bf16.mxu0 0
        %1211 = vmatpush2.bf16.msra.mxu0 0
        %1212 = vmatprep.subr.bf16.mxu0 0
        %1213 = vmatpush2.bf16.msra.mxu0 0
        %1214 = vmatprep.subr.bf16.mxu0 0
        %1215 = vmatpush2.bf16.msra.mxu0 0
        %1216 = vmatprep.subr.bf16.mxu0 0
        %1217 = vmatpush2.bf16.msra.mxu0 0
        %1218 = vmatprep.subr.bf16.mxu0 0
        %1219 = vmatpush2.bf16.msra.mxu0 0
        %1220 = vmatprep.subr.bf16.mxu0 0
        %1221 = vmatpush2.bf16.msra.mxu0 0
        %1222 = vmatprep.subr.bf16.mxu0 0
        %1223 = vmatpush2.bf16.msra.mxu0 0
        %1224 = vmatprep.mubr.bf16.mxu0 0
        %1225 = vmatmul.mubr.bf16.gmra.mxu0 %v1187
        %v1226 = vpop.f32.mrf.mxu0
        %v1227 = vadd.f32 0.0, %v1226
        %v1228 = vpop.f32.mrf.mxu0
        %v1229 = vpop.f32.mrf.mxu0
        %v1230 = vpop.f32.mrf.mxu0
        %1231 = vdwg.mxu0
        %v1232 = vrcp.pop %v1129
        %v1233 = vrcp.pop %v1132
        %v1234 = vmul.f32 %v1179, %v1232
        %v1235 = vmul.f32 %v1227, %v1233
        %1236 = vrot.lane.b32.xlu0 %v1014, 120
        %v1237 = vpop.permute.xlu0 %1236
        %1238 = vrot.lane.b32.xlu0 %v1014, 88
        %v1239 = vpop.permute.xlu0 %1238
        %v1241 = vsel %vm1019, %v1237, 0
        %v1244 = vsel %vm1019, %v1239, 0
        %1246 = vmatprep.subr.bf16.mxu0 0
        %1247 = vmatpush1.bf16.xpose.msra.mxu0 0
        %1248 = vmatprep.subr.bf16.mxu0 0
        %1249 = vmatpush1.bf16.xpose.msra.mxu0 0
        %1250 = vmatprep.subr.bf16.mxu0 0
        %1251 = vmatpush1.bf16.xpose.msra.mxu0 0
        %1252 = vmatprep.subr.bf16.mxu0 0
        %1253 = vmatpush1.bf16.xpose.msra.mxu0 0
        %1254 = vmatprep.subr.bf16.mxu0 0
        %1255 = vmatpush1.bf16.xpose.msra.mxu0 0
        %1256 = vmatprep.subr.bf16.mxu0 0
        %1257 = vmatpush1.bf16.xpose.msra.mxu0 0
        %1258 = vmatprep.subr.bf16.mxu0 0
        %1259 = vmatpush1.bf16.xpose.msra.mxu0 0
        %1260 = vmatprep.subr.bf16.mxu0 0
        %1261 = vmatpush1.bf16.xpose.msra.mxu0 %v1244
        %1262 = vmatprep.subr.bf16.mxu0 0
        %1263 = vmatpush2.bf16.xpose.msra.mxu0 0
        %1264 = vmatprep.subr.bf16.mxu0 0
        %1265 = vmatpush2.bf16.xpose.msra.mxu0 0
        %1266 = vmatprep.subr.bf16.mxu0 0
        %1267 = vmatpush2.bf16.xpose.msra.mxu0 0
        %1268 = vmatprep.subr.bf16.mxu0 0
        %1269 = vmatpush2.bf16.xpose.msra.mxu0 0
        %1270 = vmatprep.subr.bf16.mxu0 0
        %1271 = vmatpush2.bf16.xpose.msra.mxu0 0
        %1272 = vmatprep.subr.bf16.mxu0 0
        %1273 = vmatpush2.bf16.xpose.msra.mxu0 0
        %1274 = vmatprep.subr.bf16.mxu0 0
        %1275 = vmatpush2.bf16.xpose.msra.mxu0 0
        %1276 = vmatprep.subr.bf16.mxu0 0
        %1277 = vmatpush2.bf16.xpose.msra.mxu0 0
        %1278 = vmatprep.mubr.bf16.mxu0 0
        %1279 = vmatmul.mubr.bf16.gmra.mxu0 %v1241
        %v1280 = vpop.f32.mrf.mxu0
        %v1281 = vadd.f32 %v1007, %v1280
        %v1282 = vpop.f32.mrf.mxu0
        %v1283 = vpop.f32.mrf.mxu0
        %v1284 = vpop.f32.mrf.mxu0
        %1285 = vdwg.mxu0
        %1286 = vrot.lane.b32.xlu0 %v1015, 120
        %v1287 = vpop.permute.xlu0 %1286
        %1288 = vrot.lane.b32.xlu0 %v1015, 88
        %v1289 = vpop.permute.xlu0 %1288
        %v1291 = vsel %vm1019, %v1287, 0
        %v1294 = vsel %vm1019, %v1289, 0
        %1296 = vmatprep.subr.bf16.mxu0 0
        %1297 = vmatpush1.bf16.xpose.msra.mxu0 0
        %1298 = vmatprep.subr.bf16.mxu0 0
        %1299 = vmatpush1.bf16.xpose.msra.mxu0 0
        %1300 = vmatprep.subr.bf16.mxu0 0
        %1301 = vmatpush1.bf16.xpose.msra.mxu0 0
        %1302 = vmatprep.subr.bf16.mxu0 0
        %1303 = vmatpush1.bf16.xpose.msra.mxu0 0
        %1304 = vmatprep.subr.bf16.mxu0 0
        %1305 = vmatpush1.bf16.xpose.msra.mxu0 0
        %1306 = vmatprep.subr.bf16.mxu0 0
        %1307 = vmatpush1.bf16.xpose.msra.mxu0 0
        %1308 = vmatprep.subr.bf16.mxu0 0
        %1309 = vmatpush1.bf16.xpose.msra.mxu0 0
        %1310 = vmatprep.subr.bf16.mxu0 0
        %1311 = vmatpush1.bf16.xpose.msra.mxu0 %v1294
        %1312 = vmatprep.subr.bf16.mxu0 0
        %1313 = vmatpush2.bf16.xpose.msra.mxu0 0
        %1314 = vmatprep.subr.bf16.mxu0 0
        %1315 = vmatpush2.bf16.xpose.msra.mxu0 0
        %1316 = vmatprep.subr.bf16.mxu0 0
        %1317 = vmatpush2.bf16.xpose.msra.mxu0 0
        %1318 = vmatprep.subr.bf16.mxu0 0
        %1319 = vmatpush2.bf16.xpose.msra.mxu0 0
        %1320 = vmatprep.subr.bf16.mxu0 0
        %1321 = vmatpush2.bf16.xpose.msra.mxu0 0
        %1322 = vmatprep.subr.bf16.mxu0 0
        %1323 = vmatpush2.bf16.xpose.msra.mxu0 0
        %1324 = vmatprep.subr.bf16.mxu0 0
        %1325 = vmatpush2.bf16.xpose.msra.mxu0 0
        %1326 = vmatprep.subr.bf16.mxu0 0
        %1327 = vmatpush2.bf16.xpose.msra.mxu0 0
        %1328 = vmatprep.mubr.bf16.mxu0 0
        %1329 = vmatmul.mubr.bf16.gmra.mxu0 %v1291
        %v1330 = vpop.f32.mrf.mxu0
        %v1331 = vadd.f32 %v1011, %v1330
        %v1332 = vpop.f32.mrf.mxu0
        %v1333 = vpop.f32.mrf.mxu0
        %v1334 = vpop.f32.mrf.mxu0
        %1335 = vdwg.mxu0
        %v1336 = vsel %vm1019, %v1281, -inf
        %1337 = vmax.xlane.f32.xlu0 %v1336
        %v1338 = vpop.xlane.xlu0 %1337
        %v1339 = vsel %vm1019, %v1331, -inf
        %1340 = vmax.xlane.f32.xlu0 %v1339
        %v1341 = vpop.xlane.xlu0 %1340
        %v1342 = vsub.f32 %v1281, %v1338
        %v1343 = vsub.f32 %v1331, %v1341
        %v1344 = vmul.f32 %v1342, 1.442695
        %v1345 = vpow.pop %v1344
        %v1346 = vmul.f32 %v1343, 1.442695
        %v1347 = vpow.pop %v1346
        %v1348 = vsel %vm1019, %v1345, 0.0
        %1349 = vadd.xlane.f32.xlu0 %v1348
        %v1350 = vpop.xlane.xlu0 %1349
        %v1351 = vsel %vm1019, %v1347, 0.0
        %1352 = vadd.xlane.f32.xlu0 %v1351
        %v1353 = vpop.xlane.xlu0 %1352
        %v1354 = vpack.c.bf16 %v1345, %v1345
        %v1355 = vpack.c.bf16 %v1347, %v1347
        %1356 = vrot.lane.b32.xlu0 %v1014, 56
        %v1357 = vpop.permute.xlu0 %1356
        %v1359 = vsel %vm1019, %v1354, 0
        %v1362 = vsel %vm1140, %v1357, 0
        %1364 = vmatprep.subr.bf16.mxu0 0
        %1365 = vmatpush1.bf16.msra.mxu0 0
        %1366 = vmatprep.subr.bf16.mxu0 0
        %1367 = vmatpush1.bf16.msra.mxu0 0
        %1368 = vmatprep.subr.bf16.mxu0 0
        %1369 = vmatpush1.bf16.msra.mxu0 0
        %1370 = vmatprep.subr.bf16.mxu0 0
        %1371 = vmatpush1.bf16.msra.mxu0 0
        %1372 = vmatprep.subr.bf16.mxu0 0
        %1373 = vmatpush1.bf16.msra.mxu0 0
        %1374 = vmatprep.subr.bf16.mxu0 0
        %1375 = vmatpush1.bf16.msra.mxu0 0
        %1376 = vmatprep.subr.bf16.mxu0 0
        %1377 = vmatpush1.bf16.msra.mxu0 0
        %1378 = vmatprep.subr.bf16.mxu0 0
        %1379 = vmatpush1.bf16.msra.mxu0 %v1362
        %1380 = vmatprep.subr.bf16.mxu0 0
        %1381 = vmatpush2.bf16.msra.mxu0 0
        %1382 = vmatprep.subr.bf16.mxu0 0
        %1383 = vmatpush2.bf16.msra.mxu0 0
        %1384 = vmatprep.subr.bf16.mxu0 0
        %1385 = vmatpush2.bf16.msra.mxu0 0
        %1386 = vmatprep.subr.bf16.mxu0 0
        %1387 = vmatpush2.bf16.msra.mxu0 0
        %1388 = vmatprep.subr.bf16.mxu0 0
        %1389 = vmatpush2.bf16.msra.mxu0 0
        %1390 = vmatprep.subr.bf16.mxu0 0
        %1391 = vmatpush2.bf16.msra.mxu0 0
        %1392 = vmatprep.subr.bf16.mxu0 0
        %1393 = vmatpush2.bf16.msra.mxu0 0
        %1394 = vmatprep.subr.bf16.mxu0 0
        %1395 = vmatpush2.bf16.msra.mxu0 0
        %1396 = vmatprep.mubr.bf16.mxu0 0
        %1397 = vmatmul.mubr.bf16.gmra.mxu0 %v1359
        %v1398 = vpop.f32.mrf.mxu0
        %v1399 = vadd.f32 0.0, %v1398
        %v1400 = vpop.f32.mrf.mxu0
        %v1401 = vpop.f32.mrf.mxu0
        %v1402 = vpop.f32.mrf.mxu0
        %1403 = vdwg.mxu0
        %1404 = vrot.lane.b32.xlu0 %v1015, 56
        %v1405 = vpop.permute.xlu0 %1404
        %v1407 = vsel %vm1019, %v1355, 0
        %v1410 = vsel %vm1140, %v1405, 0
        %1412 = vmatprep.subr.bf16.mxu0 0
        %1413 = vmatpush1.bf16.msra.mxu0 0
        %1414 = vmatprep.subr.bf16.mxu0 0
        %1415 = vmatpush1.bf16.msra.mxu0 0
        %1416 = vmatprep.subr.bf16.mxu0 0
        %1417 = vmatpush1.bf16.msra.mxu0 0
        %1418 = vmatprep.subr.bf16.mxu0 0
        %1419 = vmatpush1.bf16.msra.mxu0 0
        %1420 = vmatprep.subr.bf16.mxu0 0
        %1421 = vmatpush1.bf16.msra.mxu0 0
        %1422 = vmatprep.subr.bf16.mxu0 0
        %1423 = vmatpush1.bf16.msra.mxu0 0
        %1424 = vmatprep.subr.bf16.mxu0 0
        %1425 = vmatpush1.bf16.msra.mxu0 0
        %1426 = vmatprep.subr.bf16.mxu0 0
        %1427 = vmatpush1.bf16.msra.mxu0 %v1410
        %1428 = vmatprep.subr.bf16.mxu0 0
        %1429 = vmatpush2.bf16.msra.mxu0 0
        %1430 = vmatprep.subr.bf16.mxu0 0
        %1431 = vmatpush2.bf16.msra.mxu0 0
        %1432 = vmatprep.subr.bf16.mxu0 0
        %1433 = vmatpush2.bf16.msra.mxu0 0
        %1434 = vmatprep.subr.bf16.mxu0 0
        %1435 = vmatpush2.bf16.msra.mxu0 0
        %1436 = vmatprep.subr.bf16.mxu0 0
        %1437 = vmatpush2.bf16.msra.mxu0 0
        %1438 = vmatprep.subr.bf16.mxu0 0
        %1439 = vmatpush2.bf16.msra.mxu0 0
        %1440 = vmatprep.subr.bf16.mxu0 0
        %1441 = vmatpush2.bf16.msra.mxu0 0
        %1442 = vmatprep.subr.bf16.mxu0 0
        %1443 = vmatpush2.bf16.msra.mxu0 0
        %1444 = vmatprep.mubr.bf16.mxu0 0
        %1445 = vmatmul.mubr.bf16.gmra.mxu0 %v1407
        %v1446 = vpop.f32.mrf.mxu0
        %v1447 = vadd.f32 0.0, %v1446
        %v1448 = vpop.f32.mrf.mxu0
        %v1449 = vpop.f32.mrf.mxu0
        %v1450 = vpop.f32.mrf.mxu0
        %1451 = vdwg.mxu0
        %v1452 = vrcp.pop %v1350
        %v1453 = vrcp.pop %v1353
        %v1454 = vmul.f32 %v1399, %v1452
        %v1455 = vmul.f32 %v1447, %v1453
        %1456 = vrot.lane.b32.xlu0 %v1014, 112
        %v1457 = vpop.permute.xlu0 %1456
        %1458 = vrot.lane.b32.xlu0 %v1014, 80
        %v1459 = vpop.permute.xlu0 %1458
        %v1461 = vsel %vm1019, %v1457, 0
        %v1464 = vsel %vm1019, %v1459, 0
        %1466 = vmatprep.subr.bf16.mxu0 0
        %1467 = vmatpush1.bf16.xpose.msra.mxu0 0
        %1468 = vmatprep.subr.bf16.mxu0 0
        %1469 = vmatpush1.bf16.xpose.msra.mxu0 0
        %1470 = vmatprep.subr.bf16.mxu0 0
        %1471 = vmatpush1.bf16.xpose.msra.mxu0 0
        %1472 = vmatprep.subr.bf16.mxu0 0
        %1473 = vmatpush1.bf16.xpose.msra.mxu0 0
        %1474 = vmatprep.subr.bf16.mxu0 0
        %1475 = vmatpush1.bf16.xpose.msra.mxu0 0
        %1476 = vmatprep.subr.bf16.mxu0 0
        %1477 = vmatpush1.bf16.xpose.msra.mxu0 0
        %1478 = vmatprep.subr.bf16.mxu0 0
        %1479 = vmatpush1.bf16.xpose.msra.mxu0 0
        %1480 = vmatprep.subr.bf16.mxu0 0
        %1481 = vmatpush1.bf16.xpose.msra.mxu0 %v1464
        %1482 = vmatprep.subr.bf16.mxu0 0
        %1483 = vmatpush2.bf16.xpose.msra.mxu0 0
        %1484 = vmatprep.subr.bf16.mxu0 0
        %1485 = vmatpush2.bf16.xpose.msra.mxu0 0
        %1486 = vmatprep.subr.bf16.mxu0 0
        %1487 = vmatpush2.bf16.xpose.msra.mxu0 0
        %1488 = vmatprep.subr.bf16.mxu0 0
        %1489 = vmatpush2.bf16.xpose.msra.mxu0 0
        %1490 = vmatprep.subr.bf16.mxu0 0
        %1491 = vmatpush2.bf16.xpose.msra.mxu0 0
        %1492 = vmatprep.subr.bf16.mxu0 0
        %1493 = vmatpush2.bf16.xpose.msra.mxu0 0
        %1494 = vmatprep.subr.bf16.mxu0 0
        %1495 = vmatpush2.bf16.xpose.msra.mxu0 0
        %1496 = vmatprep.subr.bf16.mxu0 0
        %1497 = vmatpush2.bf16.xpose.msra.mxu0 0
        %1498 = vmatprep.mubr.bf16.mxu0 0
        %1499 = vmatmul.mubr.bf16.gmra.mxu0 %v1461
        %v1500 = vpop.f32.mrf.mxu0
        %v1501 = vadd.f32 %v1007, %v1500
        %v1502 = vpop.f32.mrf.mxu0
        %v1503 = vpop.f32.mrf.mxu0
        %v1504 = vpop.f32.mrf.mxu0
        %1505 = vdwg.mxu0
        %1506 = vrot.lane.b32.xlu0 %v1015, 112
        %v1507 = vpop.permute.xlu0 %1506
        %1508 = vrot.lane.b32.xlu0 %v1015, 80
        %v1509 = vpop.permute.xlu0 %1508
        %v1511 = vsel %vm1019, %v1507, 0
        %v1514 = vsel %vm1019, %v1509, 0
        %1516 = vmatprep.subr.bf16.mxu0 0
        %1517 = vmatpush1.bf16.xpose.msra.mxu0 0
        %1518 = vmatprep.subr.bf16.mxu0 0
        %1519 = vmatpush1.bf16.xpose.msra.mxu0 0
        %1520 = vmatprep.subr.bf16.mxu0 0
        %1521 = vmatpush1.bf16.xpose.msra.mxu0 0
        %1522 = vmatprep.subr.bf16.mxu0 0
        %1523 = vmatpush1.bf16.xpose.msra.mxu0 0
        %1524 = vmatprep.subr.bf16.mxu0 0
        %1525 = vmatpush1.bf16.xpose.msra.mxu0 0
        %1526 = vmatprep.subr.bf16.mxu0 0
        %1527 = vmatpush1.bf16.xpose.msra.mxu0 0
        %1528 = vmatprep.subr.bf16.mxu0 0
        %1529 = vmatpush1.bf16.xpose.msra.mxu0 0
        %1530 = vmatprep.subr.bf16.mxu0 0
        %1531 = vmatpush1.bf16.xpose.msra.mxu0 %v1514
        %1532 = vmatprep.subr.bf16.mxu0 0
        %1533 = vmatpush2.bf16.xpose.msra.mxu0 0
        %1534 = vmatprep.subr.bf16.mxu0 0
        %1535 = vmatpush2.bf16.xpose.msra.mxu0 0
        %1536 = vmatprep.subr.bf16.mxu0 0
        %1537 = vmatpush2.bf16.xpose.msra.mxu0 0
        %1538 = vmatprep.subr.bf16.mxu0 0
        %1539 = vmatpush2.bf16.xpose.msra.mxu0 0
        %1540 = vmatprep.subr.bf16.mxu0 0
        %1541 = vmatpush2.bf16.xpose.msra.mxu0 0
        %1542 = vmatprep.subr.bf16.mxu0 0
        %1543 = vmatpush2.bf16.xpose.msra.mxu0 0
        %1544 = vmatprep.subr.bf16.mxu0 0
        %1545 = vmatpush2.bf16.xpose.msra.mxu0 0
        %1546 = vmatprep.subr.bf16.mxu0 0
        %1547 = vmatpush2.bf16.xpose.msra.mxu0 0
        %1548 = vmatprep.mubr.bf16.mxu0 0
        %1549 = vmatmul.mubr.bf16.gmra.mxu0 %v1511
        %v1550 = vpop.f32.mrf.mxu0
        %v1551 = vadd.f32 %v1011, %v1550
        %v1552 = vpop.f32.mrf.mxu0
        %v1553 = vpop.f32.mrf.mxu0
        %v1554 = vpop.f32.mrf.mxu0
        %1555 = vdwg.mxu0
        %v1556 = vsel %vm1019, %v1501, -inf
        %1557 = vmax.xlane.f32.xlu0 %v1556
        %v1558 = vpop.xlane.xlu0 %1557
        %v1559 = vsel %vm1019, %v1551, -inf
        %1560 = vmax.xlane.f32.xlu0 %v1559
        %v1561 = vpop.xlane.xlu0 %1560
        %v1562 = vsub.f32 %v1501, %v1558
        %v1563 = vsub.f32 %v1551, %v1561
        %v1564 = vmul.f32 %v1562, 1.442695
        %v1565 = vpow.pop %v1564
        %v1566 = vmul.f32 %v1563, 1.442695
        %v1567 = vpow.pop %v1566
        %v1568 = vsel %vm1019, %v1565, 0.0
        %1569 = vadd.xlane.f32.xlu0 %v1568
        %v1570 = vpop.xlane.xlu0 %1569
        %v1571 = vsel %vm1019, %v1567, 0.0
        %1572 = vadd.xlane.f32.xlu0 %v1571
        %v1573 = vpop.xlane.xlu0 %1572
        %v1574 = vpack.c.bf16 %v1565, %v1565
        %v1575 = vpack.c.bf16 %v1567, %v1567
        %1576 = vrot.lane.b32.xlu0 %v1014, 48
        %v1577 = vpop.permute.xlu0 %1576
        %v1579 = vsel %vm1019, %v1574, 0
        %v1582 = vsel %vm1140, %v1577, 0
        %1584 = vmatprep.subr.bf16.mxu0 0
        %1585 = vmatpush1.bf16.msra.mxu0 0
        %1586 = vmatprep.subr.bf16.mxu0 0
        %1587 = vmatpush1.bf16.msra.mxu0 0
        %1588 = vmatprep.subr.bf16.mxu0 0
        %1589 = vmatpush1.bf16.msra.mxu0 0
        %1590 = vmatprep.subr.bf16.mxu0 0
        %1591 = vmatpush1.bf16.msra.mxu0 0
        %1592 = vmatprep.subr.bf16.mxu0 0
        %1593 = vmatpush1.bf16.msra.mxu0 0
        %1594 = vmatprep.subr.bf16.mxu0 0
        %1595 = vmatpush1.bf16.msra.mxu0 0
        %1596 = vmatprep.subr.bf16.mxu0 0
        %1597 = vmatpush1.bf16.msra.mxu0 0
        %1598 = vmatprep.subr.bf16.mxu0 0
        %1599 = vmatpush1.bf16.msra.mxu0 %v1582
        %1600 = vmatprep.subr.bf16.mxu0 0
        %1601 = vmatpush2.bf16.msra.mxu0 0
        %1602 = vmatprep.subr.bf16.mxu0 0
        %1603 = vmatpush2.bf16.msra.mxu0 0
        %1604 = vmatprep.subr.bf16.mxu0 0
        %1605 = vmatpush2.bf16.msra.mxu0 0
        %1606 = vmatprep.subr.bf16.mxu0 0
        %1607 = vmatpush2.bf16.msra.mxu0 0
        %1608 = vmatprep.subr.bf16.mxu0 0
        %1609 = vmatpush2.bf16.msra.mxu0 0
        %1610 = vmatprep.subr.bf16.mxu0 0
        %1611 = vmatpush2.bf16.msra.mxu0 0
        %1612 = vmatprep.subr.bf16.mxu0 0
        %1613 = vmatpush2.bf16.msra.mxu0 0
        %1614 = vmatprep.subr.bf16.mxu0 0
        %1615 = vmatpush2.bf16.msra.mxu0 0
        %1616 = vmatprep.mubr.bf16.mxu0 0
        %1617 = vmatmul.mubr.bf16.gmra.mxu0 %v1579
        %v1618 = vpop.f32.mrf.mxu0
        %v1619 = vadd.f32 0.0, %v1618
        %v1620 = vpop.f32.mrf.mxu0
        %v1621 = vpop.f32.mrf.mxu0
        %v1622 = vpop.f32.mrf.mxu0
        %1623 = vdwg.mxu0
        %1624 = vrot.lane.b32.xlu0 %v1015, 48
        %v1625 = vpop.permute.xlu0 %1624
        %v1627 = vsel %vm1019, %v1575, 0
        %v1630 = vsel %vm1140, %v1625, 0
        %1632 = vmatprep.subr.bf16.mxu0 0
        %1633 = vmatpush1.bf16.msra.mxu0 0
        %1634 = vmatprep.subr.bf16.mxu0 0
        %1635 = vmatpush1.bf16.msra.mxu0 0
        %1636 = vmatprep.subr.bf16.mxu0 0
        %1637 = vmatpush1.bf16.msra.mxu0 0
        %1638 = vmatprep.subr.bf16.mxu0 0
        %1639 = vmatpush1.bf16.msra.mxu0 0
        %1640 = vmatprep.subr.bf16.mxu0 0
        %1641 = vmatpush1.bf16.msra.mxu0 0
        %1642 = vmatprep.subr.bf16.mxu0 0
        %1643 = vmatpush1.bf16.msra.mxu0 0
        %1644 = vmatprep.subr.bf16.mxu0 0
        %1645 = vmatpush1.bf16.msra.mxu0 0
        %1646 = vmatprep.subr.bf16.mxu0 0
        %1647 = vmatpush1.bf16.msra.mxu0 %v1630
        %1648 = vmatprep.subr.bf16.mxu0 0
        %1649 = vmatpush2.bf16.msra.mxu0 0
        %1650 = vmatprep.subr.bf16.mxu0 0
        %1651 = vmatpush2.bf16.msra.mxu0 0
        %1652 = vmatprep.subr.bf16.mxu0 0
        %1653 = vmatpush2.bf16.msra.mxu0 0
        %1654 = vmatprep.subr.bf16.mxu0 0
        %1655 = vmatpush2.bf16.msra.mxu0 0
        %1656 = vmatprep.subr.bf16.mxu0 0
        %1657 = vmatpush2.bf16.msra.mxu0 0
        %1658 = vmatprep.subr.bf16.mxu0 0
        %1659 = vmatpush2.bf16.msra.mxu0 0
        %1660 = vmatprep.subr.bf16.mxu0 0
        %1661 = vmatpush2.bf16.msra.mxu0 0
        %1662 = vmatprep.subr.bf16.mxu0 0
        %1663 = vmatpush2.bf16.msra.mxu0 0
        %1664 = vmatprep.mubr.bf16.mxu0 0
        %1665 = vmatmul.mubr.bf16.gmra.mxu0 %v1627
        %v1666 = vpop.f32.mrf.mxu0
        %v1667 = vadd.f32 0.0, %v1666
        %v1668 = vpop.f32.mrf.mxu0
        %v1669 = vpop.f32.mrf.mxu0
        %v1670 = vpop.f32.mrf.mxu0
        %1671 = vdwg.mxu0
        %v1672 = vrcp.pop %v1570
        %v1673 = vrcp.pop %v1573
        %v1674 = vmul.f32 %v1619, %v1672
        %v1675 = vmul.f32 %v1667, %v1673
        %1676 = vrot.lane.b32.xlu0 %v1014, 104
        %v1677 = vpop.permute.xlu0 %1676
        %1678 = vrot.lane.b32.xlu0 %v1014, 72
        %v1679 = vpop.permute.xlu0 %1678
        %v1681 = vsel %vm1019, %v1677, 0
        %v1684 = vsel %vm1019, %v1679, 0
        %1686 = vmatprep.subr.bf16.mxu0 0
        %1687 = vmatpush1.bf16.xpose.msra.mxu0 0
        %1688 = vmatprep.subr.bf16.mxu0 0
        %1689 = vmatpush1.bf16.xpose.msra.mxu0 0
        %1690 = vmatprep.subr.bf16.mxu0 0
        %1691 = vmatpush1.bf16.xpose.msra.mxu0 0
        %1692 = vmatprep.subr.bf16.mxu0 0
        %1693 = vmatpush1.bf16.xpose.msra.mxu0 0
        %1694 = vmatprep.subr.bf16.mxu0 0
        %1695 = vmatpush1.bf16.xpose.msra.mxu0 0
        %1696 = vmatprep.subr.bf16.mxu0 0
        %1697 = vmatpush1.bf16.xpose.msra.mxu0 0
        %1698 = vmatprep.subr.bf16.mxu0 0
        %1699 = vmatpush1.bf16.xpose.msra.mxu0 0
        %1700 = vmatprep.subr.bf16.mxu0 0
        %1701 = vmatpush1.bf16.xpose.msra.mxu0 %v1684
        %1702 = vmatprep.subr.bf16.mxu0 0
        %1703 = vmatpush2.bf16.xpose.msra.mxu0 0
        %1704 = vmatprep.subr.bf16.mxu0 0
        %1705 = vmatpush2.bf16.xpose.msra.mxu0 0
        %1706 = vmatprep.subr.bf16.mxu0 0
        %1707 = vmatpush2.bf16.xpose.msra.mxu0 0
        %1708 = vmatprep.subr.bf16.mxu0 0
        %1709 = vmatpush2.bf16.xpose.msra.mxu0 0
        %1710 = vmatprep.subr.bf16.mxu0 0
        %1711 = vmatpush2.bf16.xpose.msra.mxu0 0
        %1712 = vmatprep.subr.bf16.mxu0 0
        %1713 = vmatpush2.bf16.xpose.msra.mxu0 0
        %1714 = vmatprep.subr.bf16.mxu0 0
        %1715 = vmatpush2.bf16.xpose.msra.mxu0 0
        %1716 = vmatprep.subr.bf16.mxu0 0
        %1717 = vmatpush2.bf16.xpose.msra.mxu0 0
        %1718 = vmatprep.mubr.bf16.mxu0 0
        %1719 = vmatmul.mubr.bf16.gmra.mxu0 %v1681
        %v1720 = vpop.f32.mrf.mxu0
        %v1721 = vadd.f32 %v1007, %v1720
        %v1722 = vpop.f32.mrf.mxu0
        %v1723 = vpop.f32.mrf.mxu0
        %v1724 = vpop.f32.mrf.mxu0
        %1725 = vdwg.mxu0
        %1726 = vrot.lane.b32.xlu0 %v1015, 104
        %v1727 = vpop.permute.xlu0 %1726
        %1728 = vrot.lane.b32.xlu0 %v1015, 72
        %v1729 = vpop.permute.xlu0 %1728
        %v1731 = vsel %vm1019, %v1727, 0
        %v1734 = vsel %vm1019, %v1729, 0
        %1736 = vmatprep.subr.bf16.mxu0 0
        %1737 = vmatpush1.bf16.xpose.msra.mxu0 0
        %1738 = vmatprep.subr.bf16.mxu0 0
        %1739 = vmatpush1.bf16.xpose.msra.mxu0 0
        %1740 = vmatprep.subr.bf16.mxu0 0
        %1741 = vmatpush1.bf16.xpose.msra.mxu0 0
        %1742 = vmatprep.subr.bf16.mxu0 0
        %1743 = vmatpush1.bf16.xpose.msra.mxu0 0
        %1744 = vmatprep.subr.bf16.mxu0 0
        %1745 = vmatpush1.bf16.xpose.msra.mxu0 0
        %1746 = vmatprep.subr.bf16.mxu0 0
        %1747 = vmatpush1.bf16.xpose.msra.mxu0 0
        %1748 = vmatprep.subr.bf16.mxu0 0
        %1749 = vmatpush1.bf16.xpose.msra.mxu0 0
        %1750 = vmatprep.subr.bf16.mxu0 0
        %1751 = vmatpush1.bf16.xpose.msra.mxu0 %v1734
        %1752 = vmatprep.subr.bf16.mxu0 0
        %1753 = vmatpush2.bf16.xpose.msra.mxu0 0
        %1754 = vmatprep.subr.bf16.mxu0 0
        %1755 = vmatpush2.bf16.xpose.msra.mxu0 0
        %1756 = vmatprep.subr.bf16.mxu0 0
        %1757 = vmatpush2.bf16.xpose.msra.mxu0 0
        %1758 = vmatprep.subr.bf16.mxu0 0
        %1759 = vmatpush2.bf16.xpose.msra.mxu0 0
        %1760 = vmatprep.subr.bf16.mxu0 0
        %1761 = vmatpush2.bf16.xpose.msra.mxu0 0
        %1762 = vmatprep.subr.bf16.mxu0 0
        %1763 = vmatpush2.bf16.xpose.msra.mxu0 0
        %1764 = vmatprep.subr.bf16.mxu0 0
        %1765 = vmatpush2.bf16.xpose.msra.mxu0 0
        %1766 = vmatprep.subr.bf16.mxu0 0
        %1767 = vmatpush2.bf16.xpose.msra.mxu0 0
        %1768 = vmatprep.mubr.bf16.mxu0 0
        %1769 = vmatmul.mubr.bf16.gmra.mxu0 %v1731
        %v1770 = vpop.f32.mrf.mxu0
        %v1771 = vadd.f32 %v1011, %v1770
        %v1772 = vpop.f32.mrf.mxu0
        %v1773 = vpop.f32.mrf.mxu0
        %v1774 = vpop.f32.mrf.mxu0
        %1775 = vdwg.mxu0
        %v1776 = vsel %vm1019, %v1721, -inf
        %1777 = vmax.xlane.f32.xlu0 %v1776
        %v1778 = vpop.xlane.xlu0 %1777
        %v1779 = vsel %vm1019, %v1771, -inf
        %1780 = vmax.xlane.f32.xlu0 %v1779
        %v1781 = vpop.xlane.xlu0 %1780
        %v1782 = vsub.f32 %v1721, %v1778
        %v1783 = vsub.f32 %v1771, %v1781
        %v1784 = vmul.f32 %v1782, 1.442695
        %v1785 = vpow.pop %v1784
        %v1786 = vmul.f32 %v1783, 1.442695
        %v1787 = vpow.pop %v1786
        %v1788 = vsel %vm1019, %v1785, 0.0
        %1789 = vadd.xlane.f32.xlu0 %v1788
        %v1790 = vpop.xlane.xlu0 %1789
        %v1791 = vsel %vm1019, %v1787, 0.0
        %1792 = vadd.xlane.f32.xlu0 %v1791
        %v1793 = vpop.xlane.xlu0 %1792
        %v1794 = vpack.c.bf16 %v1785, %v1785
        %v1795 = vpack.c.bf16 %v1787, %v1787
        %1796 = vrot.lane.b32.xlu0 %v1014, 40
        %v1797 = vpop.permute.xlu0 %1796
        %v1799 = vsel %vm1019, %v1794, 0
        %v1802 = vsel %vm1140, %v1797, 0
        %1804 = vmatprep.subr.bf16.mxu0 0
        %1805 = vmatpush1.bf16.msra.mxu0 0
        %1806 = vmatprep.subr.bf16.mxu0 0
        %1807 = vmatpush1.bf16.msra.mxu0 0
        %1808 = vmatprep.subr.bf16.mxu0 0
        %1809 = vmatpush1.bf16.msra.mxu0 0
        %1810 = vmatprep.subr.bf16.mxu0 0
        %1811 = vmatpush1.bf16.msra.mxu0 0
        %1812 = vmatprep.subr.bf16.mxu0 0
        %1813 = vmatpush1.bf16.msra.mxu0 0
        %1814 = vmatprep.subr.bf16.mxu0 0
        %1815 = vmatpush1.bf16.msra.mxu0 0
        %1816 = vmatprep.subr.bf16.mxu0 0
        %1817 = vmatpush1.bf16.msra.mxu0 0
        %1818 = vmatprep.subr.bf16.mxu0 0
        %1819 = vmatpush1.bf16.msra.mxu0 %v1802
        %1820 = vmatprep.subr.bf16.mxu0 0
        %1821 = vmatpush2.bf16.msra.mxu0 0
        %1822 = vmatprep.subr.bf16.mxu0 0
        %1823 = vmatpush2.bf16.msra.mxu0 0
        %1824 = vmatprep.subr.bf16.mxu0 0
        %1825 = vmatpush2.bf16.msra.mxu0 0
        %1826 = vmatprep.subr.bf16.mxu0 0
        %1827 = vmatpush2.bf16.msra.mxu0 0
        %1828 = vmatprep.subr.bf16.mxu0 0
        %1829 = vmatpush2.bf16.msra.mxu0 0
        %1830 = vmatprep.subr.bf16.mxu0 0
        %1831 = vmatpush2.bf16.msra.mxu0 0
        %1832 = vmatprep.subr.bf16.mxu0 0
        %1833 = vmatpush2.bf16.msra.mxu0 0
        %1834 = vmatprep.subr.bf16.mxu0 0
        %1835 = vmatpush2.bf16.msra.mxu0 0
        %1836 = vmatprep.mubr.bf16.mxu0 0
        %1837 = vmatmul.mubr.bf16.gmra.mxu0 %v1799
        %v1838 = vpop.f32.mrf.mxu0
        %v1839 = vadd.f32 0.0, %v1838
        %v1840 = vpop.f32.mrf.mxu0
        %v1841 = vpop.f32.mrf.mxu0
        %v1842 = vpop.f32.mrf.mxu0
        %1843 = vdwg.mxu0
        %1844 = vrot.lane.b32.xlu0 %v1015, 40
        %v1845 = vpop.permute.xlu0 %1844
        %v1847 = vsel %vm1019, %v1795, 0
        %v1850 = vsel %vm1140, %v1845, 0
        %1852 = vmatprep.subr.bf16.mxu0 0
        %1853 = vmatpush1.bf16.msra.mxu0 0
        %1854 = vmatprep.subr.bf16.mxu0 0
        %1855 = vmatpush1.bf16.msra.mxu0 0
        %1856 = vmatprep.subr.bf16.mxu0 0
        %1857 = vmatpush1.bf16.msra.mxu0 0
        %1858 = vmatprep.subr.bf16.mxu0 0
        %1859 = vmatpush1.bf16.msra.mxu0 0
        %1860 = vmatprep.subr.bf16.mxu0 0
        %1861 = vmatpush1.bf16.msra.mxu0 0
        %1862 = vmatprep.subr.bf16.mxu0 0
        %1863 = vmatpush1.bf16.msra.mxu0 0
        %1864 = vmatprep.subr.bf16.mxu0 0
        %1865 = vmatpush1.bf16.msra.mxu0 0
        %1866 = vmatprep.subr.bf16.mxu0 0
        %1867 = vmatpush1.bf16.msra.mxu0 %v1850
        %1868 = vmatprep.subr.bf16.mxu0 0
        %1869 = vmatpush2.bf16.msra.mxu0 0
        %1870 = vmatprep.subr.bf16.mxu0 0
        %1871 = vmatpush2.bf16.msra.mxu0 0
        %1872 = vmatprep.subr.bf16.mxu0 0
        %1873 = vmatpush2.bf16.msra.mxu0 0
        %1874 = vmatprep.subr.bf16.mxu0 0
        %1875 = vmatpush2.bf16.msra.mxu0 0
        %1876 = vmatprep.subr.bf16.mxu0 0
        %1877 = vmatpush2.bf16.msra.mxu0 0
        %1878 = vmatprep.subr.bf16.mxu0 0
        %1879 = vmatpush2.bf16.msra.mxu0 0
        %1880 = vmatprep.subr.bf16.mxu0 0
        %1881 = vmatpush2.bf16.msra.mxu0 0
        %1882 = vmatprep.subr.bf16.mxu0 0
        %1883 = vmatpush2.bf16.msra.mxu0 0
        %1884 = vmatprep.mubr.bf16.mxu0 0
        %1885 = vmatmul.mubr.bf16.gmra.mxu0 %v1847
        %v1886 = vpop.f32.mrf.mxu0
        %v1887 = vadd.f32 0.0, %v1886
        %v1888 = vpop.f32.mrf.mxu0
        %v1889 = vpop.f32.mrf.mxu0
        %v1890 = vpop.f32.mrf.mxu0
        %1891 = vdwg.mxu0
        %v1892 = vrcp.pop %v1790
        %v1893 = vrcp.pop %v1793
        %v1894 = vmul.f32 %v1839, %v1892
        %v1895 = vmul.f32 %v1887, %v1893
        %1898 = vrot.lane.b32.xlu0 %v1454, 8
        %v1899 = vpop.permute.xlu0 %1898
        %1900 = vrot.lane.b32.xlu0 %v1455, 8
        %v1901 = vpop.permute.xlu0 %1900
        %1906 = vrot.lane.b32.xlu0 %v1674, 16
        %v1907 = vpop.permute.xlu0 %1906
        %1908 = vrot.lane.b32.xlu0 %v1675, 16
        %v1909 = vpop.permute.xlu0 %1908
        %1914 = vrot.lane.b32.xlu0 %v1894, 24
        %v1915 = vpop.permute.xlu0 %1914
        %1916 = vrot.lane.b32.xlu0 %v1895, 24
        %v1917 = vpop.permute.xlu0 %1916
        %v1920 = vsel %vm1019, %v1234, %v1899
        %v1921 = vsel %vm1019, %v1235, %v1901
        %vm1922 = vcmask 130048
        %v1923 = vsel %vm1922, %v1920, %v1907
        %v1924 = vsel %vm1922, %v1921, %v1909
        %vm1925 = vcmask 195584
        %v1926 = vsel %vm1925, %v1923, %v1915
        %v1927 = vsel %vm1925, %v1924, %v1917
        %v1928 = vpack.c.bf16 %v1927, %v1926
        %v1929 = vld [vmem:[%s788] sm:$0xf]
        %v1930 = vld [vmem:[%s788 + $0x4] sm:$0xf]
        %v1931 = vld [vmem:[%s788 + $0x8] sm:$0xf]
        %v1932 = vld [vmem:[%s788 + $0xc] sm:$0xf]
        %v1933 = vld [vmem:[%s791] sm:$0x1]
        %v1935 = vlaneseq
        %v1936 = vshrl.u32 %v1935, 7
        %v1937 = vsub.s32 0, %v1936
        %v1938 = vrot.slane %v1933, %v1937
        %v1944 = vunpack.c.l.b16 %v1929
        %v1945 = vunpack.c.l.b16 %v1930
        %v1946 = vunpack.c.l.b16 %v1931
        %v1947 = vunpack.c.l.b16 %v1932
        %v1948 = vpack.c.b16 %v1945, %v1944
        %v1949 = vpack.c.b16 %v1947, %v1946
        %v1953 = vsel %vm955, %v1928, 0
        %1955 = vmatprep.subr.bf16.mxu0 0
        %1956 = vmatpush1.bf16.msra.mxu0 0
        %1957 = vmatprep.subr.bf16.mxu0 0
        %1958 = vmatpush1.bf16.msra.mxu0 0
        %1959 = vmatprep.subr.bf16.mxu0 0
        %1960 = vmatpush1.bf16.msra.mxu0 0
        %1961 = vmatprep.subr.bf16.mxu0 0
        %1962 = vmatpush1.bf16.msra.mxu0 0
        %1963 = vmatprep.subr.bf16.mxu0 0
        %1964 = vmatpush1.bf16.msra.mxu0 0
        %1965 = vmatprep.subr.bf16.mxu0 0
        %1966 = vmatpush1.bf16.msra.mxu0 0
        %1967 = vmatprep.subr.bf16.mxu0 0
        %1968 = vmatpush1.bf16.msra.mxu0 %v1949
        %1969 = vmatprep.subr.bf16.mxu0 0
        %1970 = vmatpush1.bf16.msra.mxu0 %v1948
        %1971 = vmatprep.subr.bf16.mxu0 0
        %1972 = vmatpush2.bf16.msra.mxu0 0
        %1973 = vmatprep.subr.bf16.mxu0 0
        %1974 = vmatpush2.bf16.msra.mxu0 0
        %1975 = vmatprep.subr.bf16.mxu0 0
        %1976 = vmatpush2.bf16.msra.mxu0 0
        %1977 = vmatprep.subr.bf16.mxu0 0
        %1978 = vmatpush2.bf16.msra.mxu0 0
        %1979 = vmatprep.subr.bf16.mxu0 0
        %1980 = vmatpush2.bf16.msra.mxu0 0
        %1981 = vmatprep.subr.bf16.mxu0 0
        %1982 = vmatpush2.bf16.msra.mxu0 0
        %1983 = vmatprep.subr.bf16.mxu0 0
        %1984 = vmatpush2.bf16.msra.mxu0 0
        %1985 = vmatprep.subr.bf16.mxu0 0
        %1986 = vmatpush2.bf16.msra.mxu0 0
        %1987 = vmatprep.mubr.bf16.mxu0 0
        %1988 = vmatmul.mubr.bf16.gmra.mxu0 %v1953
        %v1989 = vpop.f32.mrf.mxu0
        %v1990 = vadd.f32 %v1938, %v1989
        %v1991 = vpop.f32.mrf.mxu0
        %v1992 = vpop.f32.mrf.mxu0
        %v1993 = vadd.f32 %v1938, %v1992
        %v1994 = vpop.f32.mrf.mxu0
        %1995 = vdwg.mxu0
        %v1996 = vadd.f32 %v929, %v1990
        %v1997 = vadd.f32 %v930, %v1993
        %v1998 = vld [vmem:[%s810] sm:$0x1]
        %v1999 = vld [vmem:[%s813] sm:$0x1]
        %v2000 = vsel %vm955, %v1996, 0.0
        %2001 = vadd.xlane.f32.xlu0 %v2000
        %v2002 = vpop.xlane.xlu0 %2001
        %v2003 = vsel %vm955, %v1997, 0.0
        %2004 = vadd.xlane.f32.xlu0 %v2003
        %v2005 = vpop.xlane.xlu0 %2004
        %v2006 = vrcp.pop 32.0
        %v2007 = vmul.f32 %v2002, %v2006
        %v2008 = vmul.f32 %v2005, %v2006
        %v2009 = vsub.f32 %v1996, %v2007
        %v2010 = vsub.f32 %v1997, %v2008
        %v2011 = vmul.f32 %v2009, %v2009
        %v2012 = vmul.f32 %v2010, %v2010
        %v2013 = vsel %vm955, %v2011, 0.0
        %2014 = vadd.xlane.f32.xlu0 %v2013
        %v2015 = vpop.xlane.xlu0 %2014
        %v2016 = vsel %vm955, %v2012, 0.0
        %2017 = vadd.xlane.f32.xlu0 %v2016
        %v2018 = vpop.xlane.xlu0 %2017
        %v2019 = vmul.f32 %v2015, %v2006
        %v2020 = vmul.f32 %v2018, %v2006
        %v2021 = vadd.f32 %v2019, 1e-05
        %v2022 = vadd.f32 %v2020, 1e-05
        %v2023 = vrsqrt.pop %v2021
        %v2024 = vrsqrt.pop %v2022
        %v2025 = vmul.f32 %v2009, %v2023
        %v2026 = vmul.f32 %v2010, %v2024
        %v2028 = vlaneseq
        %v2029 = vshrl.u32 %v2028, 7
        %v2030 = vsub.s32 0, %v2029
        %v2031 = vrot.slane %v1998, %v2030
        %v2033 = vmul.f32 %v2025, %v2031
        %v2034 = vmul.f32 %v2026, %v2031
        %v2036 = vlaneseq
        %v2037 = vshrl.u32 %v2036, 7
        %v2038 = vsub.s32 0, %v2037
        %v2039 = vrot.slane %v1999, %v2038
        %v2041 = vadd.f32 %v2033, %v2039
        %v2042 = vadd.f32 %v2034, %v2039
        %v2043 = vpack.c.bf16 %v2042, %v2041
        %v2044 = vld [vmem:[%s796] sm:$0xf]
        %v2045 = vld [vmem:[%s796 + $0x4] sm:$0xf]
        %v2046 = vld [vmem:[%s796 + $0x8] sm:$0xf]
        %v2047 = vld [vmem:[%s796 + $0xc] sm:$0xf]
        %v2048 = vld [vmem:[%s799] sm:$0x1]
        %v2050 = vlaneseq
        %v2051 = vshrl.u32 %v2050, 7
        %v2052 = vsub.s32 0, %v2051
        %v2053 = vrot.slane %v2048, %v2052
        %v2059 = vunpack.c.l.b16 %v2044
        %v2060 = vunpack.c.l.b16 %v2045
        %v2061 = vunpack.c.l.b16 %v2046
        %v2062 = vunpack.c.l.b16 %v2047
        %v2063 = vpack.c.b16 %v2060, %v2059
        %v2064 = vpack.c.b16 %v2062, %v2061
        %v2068 = vsel %vm955, %v2043, 0
        %2070 = vmatprep.subr.bf16.mxu0 0
        %2071 = vmatpush1.bf16.msra.mxu0 0
        %2072 = vmatprep.subr.bf16.mxu0 0
        %2073 = vmatpush1.bf16.msra.mxu0 0
        %2074 = vmatprep.subr.bf16.mxu0 0
        %2075 = vmatpush1.bf16.msra.mxu0 0
        %2076 = vmatprep.subr.bf16.mxu0 0
        %2077 = vmatpush1.bf16.msra.mxu0 0
        %2078 = vmatprep.subr.bf16.mxu0 0
        %2079 = vmatpush1.bf16.msra.mxu0 0
        %2080 = vmatprep.subr.bf16.mxu0 0
        %2081 = vmatpush1.bf16.msra.mxu0 0
        %2082 = vmatprep.subr.bf16.mxu0 0
        %2083 = vmatpush1.bf16.msra.mxu0 %v2064
        %2084 = vmatprep.subr.bf16.mxu0 0
        %2085 = vmatpush1.bf16.msra.mxu0 %v2063
        %2086 = vmatprep.subr.bf16.mxu0 0
        %2087 = vmatpush2.bf16.msra.mxu0 0
        %2088 = vmatprep.subr.bf16.mxu0 0
        %2089 = vmatpush2.bf16.msra.mxu0 0
        %2090 = vmatprep.subr.bf16.mxu0 0
        %2091 = vmatpush2.bf16.msra.mxu0 0
        %2092 = vmatprep.subr.bf16.mxu0 0
        %2093 = vmatpush2.bf16.msra.mxu0 0
        %2094 = vmatprep.subr.bf16.mxu0 0
        %2095 = vmatpush2.bf16.msra.mxu0 0
        %2096 = vmatprep.subr.bf16.mxu0 0
        %2097 = vmatpush2.bf16.msra.mxu0 0
        %2098 = vmatprep.subr.bf16.mxu0 0
        %2099 = vmatpush2.bf16.msra.mxu0 0
        %2100 = vmatprep.subr.bf16.mxu0 0
        %2101 = vmatpush2.bf16.msra.mxu0 0
        %2102 = vmatprep.mubr.bf16.mxu0 0
        %2103 = vmatmul.mubr.bf16.gmra.mxu0 %v2068
        %v2104 = vpop.f32.mrf.mxu0
        %v2105 = vadd.f32 %v2053, %v2104
        %v2106 = vpop.f32.mrf.mxu0
        %v2107 = vpop.f32.mrf.mxu0
        %v2108 = vadd.f32 %v2053, %v2107
        %v2109 = vpop.f32.mrf.mxu0
        %2110 = vdwg.mxu0
        %v2111 = vmax.f32 %v2105, 0.0
        %v2112 = vmax.f32 %v2108, 0.0
        %v2113 = vpack.c.bf16 %v2112, %v2111
        %v2114 = vld [vmem:[%s804] sm:$0xf]
        %v2115 = vld [vmem:[%s804 + $0x4] sm:$0xf]
        %v2116 = vld [vmem:[%s804 + $0x8] sm:$0xf]
        %v2117 = vld [vmem:[%s804 + $0xc] sm:$0xf]
        %v2118 = vld [vmem:[%s804 + $0x10] sm:$0xf]
        %v2119 = vld [vmem:[%s804 + $0x14] sm:$0xf]
        %v2120 = vld [vmem:[%s804 + $0x18] sm:$0xf]
        %v2121 = vld [vmem:[%s804 + $0x1c] sm:$0xf]
        %v2122 = vld [vmem:[%s807] sm:$0x1]
        %v2124 = vlaneseq
        %v2125 = vshrl.u32 %v2124, 7
        %v2126 = vsub.s32 0, %v2125
        %v2127 = vrot.slane %v2122, %v2126
        %v2137 = vunpack.c.l.b16 %v2114
        %v2138 = vunpack.c.l.b16 %v2115
        %v2139 = vunpack.c.l.b16 %v2116
        %v2140 = vunpack.c.l.b16 %v2117
        %v2141 = vunpack.c.l.b16 %v2118
        %v2142 = vunpack.c.l.b16 %v2119
        %v2143 = vunpack.c.l.b16 %v2120
        %v2144 = vunpack.c.l.b16 %v2121
        %v2145 = vpack.c.b16 %v2138, %v2137
        %v2146 = vpack.c.b16 %v2140, %v2139
        %v2147 = vpack.c.b16 %v2142, %v2141
        %v2148 = vpack.c.b16 %v2144, %v2143
        %vm2153 = vcmask 523264
        %v2155 = vsel %vm2153, %v2113, 0
        %2157 = vmatprep.subr.bf16.mxu0 0
        %2158 = vmatpush1.bf16.msra.mxu0 0
        %2159 = vmatprep.subr.bf16.mxu0 0
        %2160 = vmatpush1.bf16.msra.mxu0 0
        %2161 = vmatprep.subr.bf16.mxu0 0
        %2162 = vmatpush1.bf16.msra.mxu0 0
        %2163 = vmatprep.subr.bf16.mxu0 0
        %2164 = vmatpush1.bf16.msra.mxu0 0
        %2165 = vmatprep.subr.bf16.mxu0 0
        %2166 = vmatpush1.bf16.msra.mxu0 %v2148
        %2167 = vmatprep.subr.bf16.mxu0 0
        %2168 = vmatpush1.bf16.msra.mxu0 %v2147
        %2169 = vmatprep.subr.bf16.mxu0 0
        %2170 = vmatpush1.bf16.msra.mxu0 %v2146
        %2171 = vmatprep.subr.bf16.mxu0 0
        %2172 = vmatpush1.bf16.msra.mxu0 %v2145
        %2173 = vmatprep.subr.bf16.mxu0 0
        %2174 = vmatpush2.bf16.msra.mxu0 0
        %2175 = vmatprep.subr.bf16.mxu0 0
        %2176 = vmatpush2.bf16.msra.mxu0 0
        %2177 = vmatprep.subr.bf16.mxu0 0
        %2178 = vmatpush2.bf16.msra.mxu0 0
        %2179 = vmatprep.subr.bf16.mxu0 0
        %2180 = vmatpush2.bf16.msra.mxu0 0
        %2181 = vmatprep.subr.bf16.mxu0 0
        %2182 = vmatpush2.bf16.msra.mxu0 0
        %2183 = vmatprep.subr.bf16.mxu0 0
        %2184 = vmatpush2.bf16.msra.mxu0 0
        %2185 = vmatprep.subr.bf16.mxu0 0
        %2186 = vmatpush2.bf16.msra.mxu0 0
        %2187 = vmatprep.subr.bf16.mxu0 0
        %2188 = vmatpush2.bf16.msra.mxu0 0
        %2189 = vmatprep.mubr.bf16.mxu0 0
        %2190 = vmatmul.mubr.bf16.gmra.mxu0 %v2155
        %v2191 = vpop.f32.mrf.mxu0
        %v2192 = vadd.f32 %v2127, %v2191
        %v2193 = vpop.f32.mrf.mxu0
        %v2194 = vpop.f32.mrf.mxu0
        %v2195 = vadd.f32 %v2127, %v2194
        %v2196 = vpop.f32.mrf.mxu0
        %2197 = vdwg.mxu0
        %v2198 = vadd.f32 %v2041, %v2192
        %v2199 = vadd.f32 %v2042, %v2195
        %v2200 = vld [vmem:[%s816] sm:$0x1]
        %v2201 = vld [vmem:[%s819] sm:$0x1]
        %v2202 = vsel %vm955, %v2198, 0.0
        %2203 = vadd.xlane.f32.xlu0 %v2202
        %v2204 = vpop.xlane.xlu0 %2203
        %v2205 = vsel %vm955, %v2199, 0.0
        %2206 = vadd.xlane.f32.xlu0 %v2205
        %v2207 = vpop.xlane.xlu0 %2206
        %v2208 = vmul.f32 %v2204, %v2006
        %v2209 = vmul.f32 %v2207, %v2006
        %v2210 = vsub.f32 %v2198, %v2208
        %v2211 = vsub.f32 %v2199, %v2209
        %v2212 = vmul.f32 %v2210, %v2210
        %v2213 = vmul.f32 %v2211, %v2211
        %v2214 = vsel %vm955, %v2212, 0.0
        %2215 = vadd.xlane.f32.xlu0 %v2214
        %v2216 = vpop.xlane.xlu0 %2215
        %v2217 = vsel %vm955, %v2213, 0.0
        %2218 = vadd.xlane.f32.xlu0 %v2217
        %v2219 = vpop.xlane.xlu0 %2218
        %v2220 = vmul.f32 %v2216, %v2006
        %v2221 = vmul.f32 %v2219, %v2006
        %v2222 = vadd.f32 %v2220, 1e-05
        %v2223 = vadd.f32 %v2221, 1e-05
        %v2224 = vrsqrt.pop %v2222
        %v2225 = vrsqrt.pop %v2223
        %v2226 = vmul.f32 %v2210, %v2224
        %v2227 = vmul.f32 %v2211, %v2225
        %v2229 = vlaneseq
        %v2230 = vshrl.u32 %v2229, 7
        %v2231 = vsub.s32 0, %v2230
        %v2232 = vrot.slane %v2200, %v2231
        %v2234 = vmul.f32 %v2226, %v2232
        %v2235 = vmul.f32 %v2227, %v2232
        %v2237 = vlaneseq
        %v2238 = vshrl.u32 %v2237, 7
        %v2239 = vsub.s32 0, %v2238
        %v2240 = vrot.slane %v2201, %v2239
        %v2242 = vadd.f32 %v2234, %v2240
        %v2243 = vadd.f32 %v2235, %v2240
        %2244 = vst.msk [vmem:[#allocation2] sm:$0xff] %vm955, %v2242
        %2245 = vst.msk [vmem:[#allocation2 + $0x8] sm:$0xff] %vm955, %v2243
        %p2246 = scmp.eq.s32.totalorder %s39, 1
        // Predicated region
        $region113: #{tpu_custom_call.1} parent=91 // pred_check
          %p2247 = pneg %p2246
        $region114: #{tpu_custom_call.1} parent=91 // pred_check_branch
          %2249 = sbr.rel (%p2247) target = $region116
        $region115: #{tpu_custom_call.1} parent=91 // pred_region
          %v2250 = vsel %vm955, %v2242, 0.0
          %v2251 = vrot.slane %v2250, 4
          %v2252 = vadd.f32 %v2250, %v2251
          %v2253 = vrot.slane %v2252, 2
          %v2254 = vadd.f32 %v2252, %v2253
          %v2255 = vrot.slane %v2254, 1
          %v2256 = vadd.f32 %v2254, %v2255
          %v2257 = vsel %vm955, %v2243, 0.0
          %v2258 = vrot.slane %v2257, 4
          %v2259 = vadd.f32 %v2257, %v2258
          %v2260 = vrot.slane %v2259, 2
          %v2261 = vadd.f32 %v2259, %v2260
          %v2262 = vrot.slane %v2261, 1
          %v2263 = vadd.f32 %v2261, %v2262
          %v2264 = vrcp.pop 8.0
          %v2265 = vmul.f32 %v2256, %v2264
          %v2266 = vmul.f32 %v2263, %v2264
          %v2267 = vld [vmem:[%s16] sm:$0x1]
          %v2269 = vlaneseq
          %v2270 = vshrl.u32 %v2269, 7
          %v2271 = vsub.s32 0, %v2270
          %v2272 = vrot.slane %v2267, %v2271
          %v2274 = vmul.f32 %v2265, %v2272
          %v2275 = vmul.f32 %v2266, %v2272
          %v2278 = vrot.slane %v2275, 7
          %vm2279 = vcmask 1041409
          %v2280 = vsel %vm2279, %v2278, %v2274
          %vm2282 = vcmask 254976
          %v2283 = vsel %vm2282, %v2280, 0.0
          %2284 = vadd.xlane.f32.xlu0 %v2283
          %v2285 = vpop.xlane.xlu0 %2284
          %v2286 = vld [vmem:[#allocation4] sm:$0x1]
          %v2288 = vlaneseq
          %v2289 = vshrl.u32 %v2288, 7
          %v2290 = vsub.s32 0, %v2289
          %v2291 = vrot.slane %v2286, %v2290
          %v2293 = vadd.f32 %v2285, %v2291
          %vm2294 = vcmask 1024
          %2295 = vst.msk [vmem:[%s823] sm:$0x3] %vm2294, %v2293
        $region116: #{tpu_custom_call.1} parent=91 // pred_fallthru
          _
        %p2296 = scmp.lt.s32.totalorder %s38, 0
        %s2297 = scalar_select %p2296, %s38, 0
        %s2298 = smul.addr %s2297, 2
        %s2299 = scalar_lea.vmem %s18, %s2298
        // Predicated region
        $region117: #{tpu_custom_call.1} parent=91 // pred_check
          %p2300 = pneg %p507
        $region118: #{tpu_custom_call.1} parent=91 // pred_check_branch
          %2302 = sbr.rel (%p2300) target = $region120
        $region119: #{tpu_custom_call.1} parent=91 // pred_region
          _
        $region120: #{tpu_custom_call.1} parent=91 // pred_fallthru
          _
        // Predicated region
        $region121: #{tpu_custom_call.1} parent=91 // pred_check
          %p2303 = pneg %p507
        $region122: #{tpu_custom_call.1} parent=91 // pred_check_branch
          %2305 = sbr.rel (%p2303) target = $region124
        $region123: #{tpu_custom_call.1} parent=91 // pred_region
          %p2306 = scmp.lt.s32.totalorder %s38, 0
          %s2307 = scalar_select %p2306, %s38, 0
          %s2308 = smul.addr %s2307, 2
          %s2309 = scalar_lea.vmem %s18, %s2308
        $region124: #{tpu_custom_call.1} parent=91 // pred_fallthru
          _
      $region92: #{tpu_custom_call.1} parent=5 // pred_fallthru
        _
      %p2310 = scmp.le.s32.totalorder 2, %s29
      // Predicated region
      $region125: #{tpu_custom_call.1} parent=5 // pred_check
        %p2311 = pneg %p2310
      $region126: #{tpu_custom_call.1} parent=5 // pred_check_branch
        %2313 = sbr.rel (%p2311) target = $region128
      $region127: #{tpu_custom_call.1} parent=5 // pred_region
        %s2314 = ssub.s32 %s29, 2
      $region128: #{tpu_custom_call.1} parent=5 // pred_fallthru
        _
    $region6: #{tpu_custom_call.1} parent=1 // loop_footer
      %s33 = sadd.s32 1, %s29
    $region7: #{tpu_custom_call.1} parent=1 // loop_footer_branch
      %28 = sbr.rel target = $region3
    $region8: #{tpu_custom_call.1} parent=1 // loop_exit
      _
    %2315 = vsyncpa [#allocation6], 1
    %s2316 = scalar_lea.sflag [#allocation6], 1
    %2317 = vsyncpa %s2316, 1
    %2318 = vsyncpa [#allocation8], 1
    %2319 = vsyncpa [#allocation11], 1

</llo_original>
